<compile_context>
chip_gen: v7x
topology: tpu7x:2x2x1
jax: 0.10.0
libtpu: 0.0.40
codegen_flags: <defaults>
</compile_context>

<pallas_src>
import math

import jax
import jax.numpy as jnp
from jax import lax
from jax.experimental import pallas as pl
from jax.experimental.pallas import tpu as pltpu


# --------------------------------------------------------------------------
# helpers
# --------------------------------------------------------------------------
def _vmem_limit(operands, out_shapes, scratch_bytes=0):
    """Explicit scoped-VMEM budget: operands + outputs (double-buffered) + slack."""
    def nbytes(x):
        return int(math.prod(x.shape)) * jnp.dtype(x.dtype).itemsize
    total = sum(nbytes(a) for a in operands) + sum(nbytes(o) for o in out_shapes)
    return int(min(max(2 * total + scratch_bytes + (4 << 20), 16 << 20), 48 << 20))


# --------------------------------------------------------------------------
# Streamed bidirectional encoder: grid=(2 directions, T steps).
#   x block (1,B,E):   fwd reads position t, bwd reads position T-1-t
#   output (2,T,B,H):  block (1,1,B,H) written at (d, pos)
#   hidden carried in VMEM scratch; fused (E,3H)/(H,3H) gate matmuls.
# --------------------------------------------------------------------------
def encoder_kernel(x_ref, wi_ref, wh_ref, bi_ref, bh_ref, enc_ref, h_scr):
    t = pl.program_id(1)
    B, H = h_scr.shape

    @pl.when(t == 0)
    def _():
        h_scr[...] = jnp.zeros_like(h_scr)

    x = x_ref[0]                                    # (B, E) bf16
    h = h_scr[...]                                  # (B, H) f32

    gi = jnp.dot(x, wi_ref[0], preferred_element_type=jnp.float32) + bi_ref[0]
    gh = jnp.dot(h.astype(jnp.bfloat16), wh_ref[0],
                 preferred_element_type=jnp.float32) + bh_ref[0]     # (B, 3H)

    r = jax.nn.sigmoid(gi[:, 0:H] + gh[:, 0:H])
    z = jax.nn.sigmoid(gi[:, H:2 * H] + gh[:, H:2 * H])
    n = jnp.tanh(gi[:, 2 * H:3 * H] + r * gh[:, 2 * H:3 * H])
    h_new = (1.0 - z) * n + z * h

    h_scr[...] = h_new
    enc_ref[0, 0] = h_new


def encoder_stream(src_emb, p):
    T, B, E = src_emb.shape
    H = p['enc_wh'].shape[1]
    G = 3 * H
    ins = (src_emb, p['enc_wi'], p['enc_wh'], p['enc_bi'], p['enc_bh'])

    def x_map(d, t):
        return ((1 - d) * t + d * (T - 1 - t), 0, 0)

    def out_map(d, t):
        return (d, (1 - d) * t + d * (T - 1 - t), 0, 0)

    in_specs = [
        pl.BlockSpec((1, B, E), x_map),
        pl.BlockSpec((1, E, G), lambda d, t: (d, 0, 0)),
        pl.BlockSpec((1, H, G), lambda d, t: (d, 0, 0)),
        pl.BlockSpec((1, 1, G), lambda d, t: (d, 0, 0)),
        pl.BlockSpec((1, 1, G), lambda d, t: (d, 0, 0)),
    ]
    out_shape = jax.ShapeDtypeStruct((2, T, B, H), jnp.float32)
    grid_spec = pltpu.PrefetchScalarGridSpec(
        num_scalar_prefetch=0,
        grid=(2, T),
        in_specs=in_specs,
        out_specs=pl.BlockSpec((1, 1, B, H), out_map),
        scratch_shapes=[pltpu.VMEM((B, H), jnp.float32)],
    )
    return pl.pallas_call(
        encoder_kernel,
        out_shape=out_shape,
        grid_spec=grid_spec,
        compiler_params=pltpu.CompilerParams(
            dimension_semantics=("parallel", "arbitrary"),
            vmem_limit_bytes=_vmem_limit(ins, (out_shape,), 4 * B * H),
        ),
    )(*ins)


# --------------------------------------------------------------------------
# Combine kernel: enc = fwd + bwd, and the step-invariant attention projection
# eproj = enc @ Wa_e + b (hoisted out of the decoder step-0 path).
# --------------------------------------------------------------------------
def combine_kernel(enc_dir_ref, we_ref, ab_ref, enc_ref, eproj_ref):
    e = enc_dir_ref[0, 0] + enc_dir_ref[1, 0]                         # (B, H) f32
    enc_ref[0] = e
    eproj_ref[0] = (jnp.dot(e.astype(jnp.bfloat16), we_ref[...],
                            preferred_element_type=jnp.float32)
                    + ab_ref[...])


def combine_stream(enc_dir, p):
    _, T, B, H = enc_dir.shape
    ins = (enc_dir, p['attn_we'], p['attn_b'])
    in_specs = [
        pl.BlockSpec((2, 1, B, H), lambda t: (0, t, 0, 0)),
        pl.BlockSpec((H, H), lambda t: (0, 0)),
        pl.BlockSpec((1, H), lambda t: (0, 0)),
    ]
    out_shapes = (jax.ShapeDtypeStruct((T, B, H), jnp.float32),
                  jax.ShapeDtypeStruct((T, B, H), jnp.float32))
    out_specs = (pl.BlockSpec((1, B, H), lambda t: (t, 0, 0)),
                 pl.BlockSpec((1, B, H), lambda t: (t, 0, 0)))
    grid_spec = pltpu.PrefetchScalarGridSpec(
        num_scalar_prefetch=0, grid=(T,),
        in_specs=in_specs, out_specs=out_specs)
    return pl.pallas_call(
        combine_kernel,
        out_shape=out_shapes,
        grid_spec=grid_spec,
        compiler_params=pltpu.CompilerParams(
            dimension_semantics=("parallel",),
            vmem_limit_bytes=_vmem_limit(ins, out_shapes),
        ),
    )(*ins)


# --------------------------------------------------------------------------
# Fused decoder: grid=(max_len,).  Everything resident; hidden + next-step
# embedding in scratch; in-kernel greedy / teacher-forced feedback.
# --------------------------------------------------------------------------
def decoder_kernel(tf_ref,                                # SMEM (max_len,) i32 teacher flags
                   trg_ref,                               # (max_len, B, 1) i32 targets (resident)
                   init_emb_ref,                          # (B, E) f32
                   h0_ref,                                # (B, H) f32
                   enc_ref,                               # (T, B, H) f32
                   eproj_ref,                             # (T, B, H) f32 (= enc @ Wa_e + b)
                   emb_tab_ref,                           # (V, E) bf16
                   aWh_ref, v_ref,                        # attention: (H,H) bf16, (1,1,H) f32
                   wi_ref, wh_ref, bi_ref, bh_ref,        # GRU: (E+H,3H)/(H,3H) bf16, (1,3H) f32
                   ow_ref, ob_ref,                        # output: (2H,V) bf16, (1,V) f32
                   logits_ref,                            # (1, B, V) output block
                   h_scr, emb_scr):
    t = pl.program_id(0)
    T, B, H = enc_ref.shape
    V = ob_ref.shape[-1]

    @pl.when(t == 0)
    def _():
        h_scr[...] = h0_ref[...]
        emb_scr[...] = init_emb_ref[...]

    h = h_scr[...]                                        # (B, H) f32
    emb = emb_scr[...]                                    # (B, E) f32
    h_bf = h.astype(jnp.bfloat16)

    # --- attention: energy = relu(eproj + h @ Wa_h), score = energy . v
    hproj = jnp.dot(h_bf, aWh_ref[...], preferred_element_type=jnp.float32)   # (B, H)
    energy = jnp.maximum(eproj_ref[...] + hproj[None, :, :], 0.0)             # (T, B, H)
    scores = jnp.sum(energy * v_ref[...], axis=-1, keepdims=True)             # (T, B, 1)

    scores = scores - jnp.max(scores, axis=0, keepdims=True)
    e = jnp.exp(scores)
    attn = e * pl.reciprocal(jnp.sum(e, axis=0, keepdims=True), approx=True)  # (T, B, 1)
    context = jnp.sum(attn * enc_ref[...], axis=0)                            # (B, H) f32

    # --- GRU cell: single fused matmul on [emb, context], single on h.
    rnn_in = jnp.concatenate([emb, context], axis=1).astype(jnp.bfloat16)     # (B, E+H)
    gi = jnp.dot(rnn_in, wi_ref[...], preferred_element_type=jnp.float32) + bi_ref[...]
    gh = jnp.dot(h_bf, wh_ref[...], preferred_element_type=jnp.float32) + bh_ref[...]
    r = jax.nn.sigmoid(gi[:, 0:H] + gh[:, 0:H])
    z = jax.nn.sigmoid(gi[:, H:2 * H] + gh[:, H:2 * H])
    n = jnp.tanh(gi[:, 2 * H:3 * H] + r * gh[:, 2 * H:3 * H])
    h_new = (1.0 - z) * n + z * h                                             # (B, H)

    # --- output projection: single (B, 2H) @ (2H, V) matmul on [gru_out, context]
    out_in = jnp.concatenate([h_new, context], axis=1).astype(jnp.bfloat16)   # (B, 2H)
    logits = (jnp.dot(out_in, ow_ref[...], preferred_element_type=jnp.float32)
              + ob_ref[...])                                                  # (B, V)
    logits_ref[0] = logits

    # --- greedy / teacher-forced token feedback (integer domain)
    ids = lax.broadcasted_iota(jnp.int32, (B, V), 1)
    m = jnp.max(logits, axis=1, keepdims=True)
    top1 = jnp.min(jnp.where(logits >= m, ids, V), axis=1, keepdims=True)     # (B, 1) i32
    flag = tf_ref[t]                                                          # i32 scalar
    trg_tok = trg_ref[t]                                                      # (B, 1) i32
    next_tok = jnp.where(flag > 0, trg_tok, top1)                             # (B, 1) i32
    one_hot = (ids == next_tok).astype(jnp.float32).astype(jnp.bfloat16)      # (B, V)
    emb_scr[...] = jnp.dot(one_hot, emb_tab_ref[...],
                           preferred_element_type=jnp.float32)                # (B, E) f32
    h_scr[...] = h_new


def decoder_fused(tf_flags, trg_in, init_emb, h0, enc, eproj, p):
    max_len = int(tf_flags.shape[0])
    T, B, H = enc.shape
    E = init_emb.shape[1]
    V = p['out_b'].shape[-1]

    ins = (trg_in, init_emb, h0, enc, eproj, p['emb'],
           p['attn_wh'], p['attn_v'],
           p['dec_wi'], p['dec_wh'], p['dec_bi'], p['dec_bh'],
           p['out_w'], p['out_b'])

    def const_spec(a):
        nd = a.ndim
        return pl.BlockSpec(a.shape, lambda t, tf, nd=nd: (0,) * nd)

    in_specs = [const_spec(a) for a in ins]
    out_shape = jax.ShapeDtypeStruct((max_len, B, V), jnp.float32)

    grid_spec = pltpu.PrefetchScalarGridSpec(
        num_scalar_prefetch=1,                            # teacher flags -> SMEM
        grid=(max_len,),
        in_specs=in_specs,
        out_specs=pl.BlockSpec((1, B, V), lambda t, tf: (t, 0, 0)),
        scratch_shapes=[pltpu.VMEM((B, H), jnp.float32),  # hidden state
                        pltpu.VMEM((B, E), jnp.float32)], # next-step embedding
    )
    return pl.pallas_call(
        decoder_kernel,
        out_shape=out_shape,
        grid_spec=grid_spec,
        compiler_params=pltpu.CompilerParams(
            dimension_semantics=("arbitrary",),
            vmem_limit_bytes=_vmem_limit(ins, (out_shape,), 4 * B * (H + E)),
        ),
    )(tf_flags, *ins)


# --------------------------------------------------------------------------
# Full model forward (glue in plain JAX; hot paths in the fused kernels).
# --------------------------------------------------------------------------
def seq2seq_forward(src, trg, params, teacher_forcing_ratio=0.5, rng_key=None):
    if rng_key is None:
        rng_key = jax.random.PRNGKey(0)
    max_len = trg.shape[0]
    emb_table = params['emb']                              # (V, E) bf16

    src_emb = emb_table[src]                               # (T, B, E) bf16 gather (glue)
    enc_dir = encoder_stream(src_emb, params)              # (2, T, B, H) f32
    h0 = enc_dir[0, -1]                                    # fwd final hidden == hidden[:1]
    enc, eproj = combine_stream(enc_dir, params)           # (T, B, H) each

    init_emb = emb_table[src[-1]].astype(jnp.float32)      # embedding of src[-1, :]

    # TODO(synk): the reference draws random.random() per step on the host; here the
    # per-step (batch-wide) Bernoulli teacher-forcing decisions are precomputed device-side.
    tf_flags = (jax.random.uniform(rng_key, (max_len,))
                < teacher_forcing_ratio).astype(jnp.int32)
    trg_in = trg.astype(jnp.int32)[:, :, None]             # (max_len, B, 1) resident in VMEM

    return decoder_fused(tf_flags, trg_in, init_emb, h0, enc, eproj, params)


# --------------------------------------------------------------------------
# Deterministic parameter initialization (shapes implied by the module).
# Gate weights fused along the output axis: (in, 3H) ordered [r | z | n].
# Matmul weights / embedding table stored in bf16; biases in f32.
# --------------------------------------------------------------------------
def init_params(key, n_emb, emb_dim, hdim):
    bf = jnp.bfloat16

    def uni(k, shape, s, dtype=jnp.float32):
        return jax.random.uniform(k, shape, jnp.float32, -s, s).astype(dtype)

    ks = jax.random.split(key, 16)
    s_h = 1.0 / math.sqrt(hdim)
    s_2h = 1.0 / math.sqrt(2 * hdim)
    G = 3 * hdim

    p = {'emb': jax.random.normal(ks[0], (n_emb, emb_dim), jnp.float32).astype(bf)}
    # encoder bidirectional GRU, directions stacked on a leading axis [fwd, bwd]
    p['enc_wi'] = uni(ks[1], (2, emb_dim, G), s_h, bf)
    p['enc_wh'] = uni(ks[2], (2, hdim, G), s_h, bf)
    p['enc_bi'] = uni(ks[3], (2, 1, G), s_h)
    p['enc_bh'] = uni(ks[4], (2, 1, G), s_h)
    # attention: Linear(2H -> H) split into h-part / enc-part, plus v
    p['attn_wh'] = uni(ks[5], (hdim, hdim), s_2h, bf)
    p['attn_we'] = uni(ks[6], (hdim, hdim), s_2h, bf)
    p['attn_b'] = uni(ks[7], (1, hdim), s_2h)
    p['attn_v'] = uni(ks[8], (1, 1, hdim), s_h)
    # decoder GRU: input = [emb, context] -> single fused (E+H, 3H) weight
    p['dec_wi'] = uni(ks[9], (emb_dim + hdim, G), s_h, bf)
    p['dec_wh'] = uni(ks[10], (hdim, G), s_h, bf)
    p['dec_bi'] = uni(ks[11], (1, G), s_h)
    p['dec_bh'] = uni(ks[12], (1, G), s_h)
    # output: Linear(2H -> vocab) on [gru_out, context], single fused weight
    p['out_w'] = uni(ks[13], (2 * hdim, n_emb), s_2h, bf)
    p['out_b'] = uni(ks[14], (1, n_emb), s_2h)
    return p


if __name__ == "__main__":
    n_emb, emb_dim, hdim = 32, 16, 32       # vocab, embedding, hidden
    src_len, max_len, batch = 8, 6, 2

    key = jax.random.PRNGKey(0)
    kp, ks, kt, kf = jax.random.split(key, 4)
    params = init_params(kp, n_emb, emb_dim, hdim)

    src = jax.random.randint(ks, (src_len, batch), 0, n_emb, dtype=jnp.int32)
    trg = jax.random.randint(kt, (max_len, batch), 0, n_emb, dtype=jnp.int32)

    fwd = jax.jit(seq2seq_forward)
    outputs = jax.block_until_ready(fwd(src, trg, params, 0.5, kf))
    assert outputs.shape == (max_len, batch, n_emb)
    assert bool(jnp.all(jnp.isfinite(outputs)))
    print("KERNEL_OK")
</pallas_src>

<mosaic_0001>
module attributes {stable_mosaic.version = 11 : i64} {
  func.func @combine_kernel(%arg0: i32, %arg1: memref<2x1x2x32xf32, #tpu.memory_space<vmem>>, %arg2: memref<32x32xbf16, #tpu.memory_space<vmem>>, %arg3: memref<1x32xf32, #tpu.memory_space<vmem>>, %arg4: memref<1x2x32xf32, #tpu.memory_space<vmem>>, %arg5: memref<1x2x32xf32, #tpu.memory_space<vmem>>) attributes {dimension_semantics = [#tpu.dimension_semantics<parallel>], iteration_bounds = array<i64: 8>, scalar_prefetch = 0 : i64, scratch_operands = 0 : i64, tpu.core_type = #tpu.core_type<tc>, window_params = [{transform_indices = @transform_0, window_bounds = array<i64: 2, 1, 2, 32>}, {pipeline_mode = #tpu.pipeline_mode<synchronous>, transform_indices = @transform_1, window_bounds = array<i64: 32, 32>}, {pipeline_mode = #tpu.pipeline_mode<synchronous>, transform_indices = @transform_2, window_bounds = array<i64: 1, 32>}, {transform_indices = @transform_3, window_bounds = array<i64: 1, 2, 32>}, {transform_indices = @transform_4, window_bounds = array<i64: 1, 2, 32>}]} {
    %c0 = arith.constant 0 : index
    %c0_0 = arith.constant 0 : index
    %c0_1 = arith.constant 0 : index
    %c0_2 = arith.constant 0 : index
    %0 = vector.load %arg1[%c0, %c0_0, %c0_1, %c0_2] : memref<2x1x2x32xf32, #tpu.memory_space<vmem>>, vector<1x1x2x32xf32>
    %1 = vector.shape_cast %0 : vector<1x1x2x32xf32> to vector<2x32xf32>
    %c1 = arith.constant 1 : index
    %c0_3 = arith.constant 0 : index
    %c0_4 = arith.constant 0 : index
    %c0_5 = arith.constant 0 : index
    %2 = vector.load %arg1[%c1, %c0_3, %c0_4, %c0_5] : memref<2x1x2x32xf32, #tpu.memory_space<vmem>>, vector<1x1x2x32xf32>
    %3 = vector.shape_cast %2 : vector<1x1x2x32xf32> to vector<2x32xf32>
    %4 = arith.addf %1, %3 : vector<2x32xf32>
    %c0_6 = arith.constant 0 : index
    %c0_7 = arith.constant 0 : index
    %c0_8 = arith.constant 0 : index
    %5 = vector.load %arg4[%c0_6, %c0_7, %c0_8] : memref<1x2x32xf32, #tpu.memory_space<vmem>>, vector<1x2x32xf32>
    %6 = vector.shape_cast %5 : vector<1x2x32xf32> to vector<2x32xf32>
    %7 = vector.shape_cast %4 : vector<2x32xf32> to vector<1x2x32xf32>
    tpu.vector_store %arg4[%c0_6, %c0_7, %c0_8], %7 {strides = array<i32>} : memref<1x2x32xf32, #tpu.memory_space<vmem>>, vector<1x2x32xf32>,
    %8 = arith.truncf %4 : vector<2x32xf32> to vector<2x32xbf16>
    %c0_9 = arith.constant 0 : index
    %c0_10 = arith.constant 0 : index
    %9 = vector.load %arg2[%c0_9, %c0_10] : memref<32x32xbf16, #tpu.memory_space<vmem>>, vector<32x32xbf16>
    %cst = arith.constant dense<0.000000e+00> : vector<2x32xf32>
    %10 = tpu.matmul %8, %9, %cst {dimension_numbers = #tpu.dot_dimension_numbers<[1], [0], [0], [1], [0, 0, 1, 1], [], []>} : vector<2x32xbf16>, vector<32x32xbf16>, vector<2x32xf32> -> vector<2x32xf32>
    %c0_11 = arith.constant 0 : index
    %c0_12 = arith.constant 0 : index
    %11 = vector.load %arg3[%c0_11, %c0_12] : memref<1x32xf32, #tpu.memory_space<vmem>>, vector<1x32xf32>
    %12 = vector.broadcast %11 : vector<1x32xf32> to vector<2x32xf32>
    %13 = arith.addf %10, %12 : vector<2x32xf32>
    %c0_13 = arith.constant 0 : index
    %c0_14 = arith.constant 0 : index
    %c0_15 = arith.constant 0 : index
    %14 = vector.load %arg5[%c0_13, %c0_14, %c0_15] : memref<1x2x32xf32, #tpu.memory_space<vmem>>, vector<1x2x32xf32>
    %15 = vector.shape_cast %14 : vector<1x2x32xf32> to vector<2x32xf32>
    %16 = vector.shape_cast %13 : vector<2x32xf32> to vector<1x2x32xf32>
    tpu.vector_store %arg5[%c0_13, %c0_14, %c0_15], %16 {strides = array<i32>} : memref<1x2x32xf32, #tpu.memory_space<vmem>>, vector<1x2x32xf32>,
    return
  }
  func.func @transform_0(%arg0: i32) -> (i32, i32, i32, i32) {
    %c0_i32 = arith.constant 0 : i32
    %c0_i32_0 = arith.constant 0 : i32
    %c0_i32_1 = arith.constant 0 : i32
    %c0_i32_2 = arith.constant 0 : i32
    return %c0_i32, %arg0, %c0_i32_0, %c0_i32_1 : i32, i32, i32, i32
  }
  func.func @transform_1(%arg0: i32) -> (i32, i32) {
    %c0_i32 = arith.constant 0 : i32
    %c0_i32_0 = arith.constant 0 : i32
    %c0_i32_1 = arith.constant 0 : i32
    return %c0_i32, %c0_i32_0 : i32, i32
  }
  func.func @transform_2(%arg0: i32) -> (i32, i32) {
    %c0_i32 = arith.constant 0 : i32
    %c0_i32_0 = arith.constant 0 : i32
    %c0_i32_1 = arith.constant 0 : i32
    return %c0_i32, %c0_i32_0 : i32, i32
  }
  func.func @transform_3(%arg0: i32) -> (i32, i32, i32) {
    %c0_i32 = arith.constant 0 : i32
    %c0_i32_0 = arith.constant 0 : i32
    %c0_i32_1 = arith.constant 0 : i32
    return %arg0, %c0_i32, %c0_i32_0 : i32, i32, i32
  }
  func.func @transform_4(%arg0: i32) -> (i32, i32, i32) {
    %c0_i32 = arith.constant 0 : i32
    %c0_i32_0 = arith.constant 0 : i32
    %c0_i32_1 = arith.constant 0 : i32
    return %arg0, %c0_i32, %c0_i32_0 : i32, i32, i32
  }
}

module attributes {stable_mosaic.version = 11 : i64} {
  func.func @encoder_kernel(%arg0: i32, %arg1: i32, %arg2: memref<1x2x16xbf16, #tpu.memory_space<vmem>>, %arg3: memref<1x16x96xbf16, #tpu.memory_space<vmem>>, %arg4: memref<1x32x96xbf16, #tpu.memory_space<vmem>>, %arg5: memref<1x1x96xf32, #tpu.memory_space<vmem>>, %arg6: memref<1x1x96xf32, #tpu.memory_space<vmem>>, %arg7: memref<1x1x2x32xf32, #tpu.memory_space<vmem>>, %arg8: memref<2x32xf32, #tpu.memory_space<vmem>>) attributes {dimension_semantics = [#tpu.dimension_semantics<parallel>, #tpu.dimension_semantics<arbitrary>], iteration_bounds = array<i64: 2, 8>, scalar_prefetch = 0 : i64, scratch_operands = 1 : i64, tpu.core_type = #tpu.core_type<tc>, window_params = [{transform_indices = @transform_0, window_bounds = array<i64: 1, 2, 16>}, {transform_indices = @transform_1, window_bounds = array<i64: 1, 16, 96>}, {transform_indices = @transform_2, window_bounds = array<i64: 1, 32, 96>}, {transform_indices = @transform_3, window_bounds = array<i64: 1, 1, 96>}, {transform_indices = @transform_4, window_bounds = array<i64: 1, 1, 96>}, {transform_indices = @transform_5, window_bounds = array<i64: 1, 1, 2, 32>}]} {
    %c0_i32 = arith.constant 0 : i32
    %0 = arith.cmpi eq, %arg1, %c0_i32 : i32
    %1 = arith.extui %0 : i1 to i32
    %c0_i32_0 = arith.constant 0 : i32
    %2 = arith.cmpi ne, %1, %c0_i32_0 : i32
    scf.if %2 {
      %cst_27 = arith.constant 0.000000e+00 : f32
      %51 = vector.broadcast %cst_27 : f32 to vector<2x32xf32>
      %c0_28 = arith.constant 0 : index
      %c0_29 = arith.constant 0 : index
      %52 = vector.load %arg8[%c0_28, %c0_29] : memref<2x32xf32, #tpu.memory_space<vmem>>, vector<2x32xf32>
      tpu.vector_store %arg8[%c0_28, %c0_29], %51 {strides = array<i32>} : memref<2x32xf32, #tpu.memory_space<vmem>>, vector<2x32xf32>,
    } else {
    }
    %c0 = arith.constant 0 : index
    %c0_1 = arith.constant 0 : index
    %c0_2 = arith.constant 0 : index
    %3 = vector.load %arg2[%c0, %c0_1, %c0_2] : memref<1x2x16xbf16, #tpu.memory_space<vmem>>, vector<1x2x16xbf16>
    %4 = vector.shape_cast %3 : vector<1x2x16xbf16> to vector<2x16xbf16>
    %c0_3 = arith.constant 0 : index
    %c0_4 = arith.constant 0 : index
    %5 = vector.load %arg8[%c0_3, %c0_4] : memref<2x32xf32, #tpu.memory_space<vmem>>, vector<2x32xf32>
    %c0_5 = arith.constant 0 : index
    %c0_6 = arith.constant 0 : index
    %c0_7 = arith.constant 0 : index
    %6 = vector.load %arg3[%c0_5, %c0_6, %c0_7] : memref<1x16x96xbf16, #tpu.memory_space<vmem>>, vector<1x16x96xbf16>
    %7 = vector.shape_cast %6 : vector<1x16x96xbf16> to vector<16x96xbf16>
    %cst = arith.constant dense<0.000000e+00> : vector<2x96xf32>
    %8 = tpu.matmul %4, %7, %cst {dimension_numbers = #tpu.dot_dimension_numbers<[1], [0], [0], [1], [0, 0, 1, 1], [], []>} : vector<2x16xbf16>, vector<16x96xbf16>, vector<2x96xf32> -> vector<2x96xf32>
    %c0_8 = arith.constant 0 : index
    %c0_9 = arith.constant 0 : index
    %c0_10 = arith.constant 0 : index
    %9 = vector.load %arg5[%c0_8, %c0_9, %c0_10] : memref<1x1x96xf32, #tpu.memory_space<vmem>>, vector<1x1x96xf32>
    %10 = vector.shape_cast %9 : vector<1x1x96xf32> to vector<1x96xf32>
    %11 = vector.broadcast %10 : vector<1x96xf32> to vector<2x96xf32>
    %12 = arith.addf %8, %11 : vector<2x96xf32>
    %13 = arith.truncf %5 : vector<2x32xf32> to vector<2x32xbf16>
    %c0_11 = arith.constant 0 : index
    %c0_12 = arith.constant 0 : index
    %c0_13 = arith.constant 0 : index
    %14 = vector.load %arg4[%c0_11, %c0_12, %c0_13] : memref<1x32x96xbf16, #tpu.memory_space<vmem>>, vector<1x32x96xbf16>
    %15 = vector.shape_cast %14 : vector<1x32x96xbf16> to vector<32x96xbf16>
    %cst_14 = arith.constant dense<0.000000e+00> : vector<2x96xf32>
    %16 = tpu.matmul %13, %15, %cst_14 {dimension_numbers = #tpu.dot_dimension_numbers<[1], [0], [0], [1], [0, 0, 1, 1], [], []>} : vector<2x32xbf16>, vector<32x96xbf16>, vector<2x96xf32> -> vector<2x96xf32>
    %c0_15 = arith.constant 0 : index
    %c0_16 = arith.constant 0 : index
    %c0_17 = arith.constant 0 : index
    %17 = vector.load %arg6[%c0_15, %c0_16, %c0_17] : memref<1x1x96xf32, #tpu.memory_space<vmem>>, vector<1x1x96xf32>
    %18 = vector.shape_cast %17 : vector<1x1x96xf32> to vector<1x96xf32>
    %19 = vector.broadcast %18 : vector<1x96xf32> to vector<2x96xf32>
    %20 = arith.addf %16, %19 : vector<2x96xf32>
    %21 = vector.extract_strided_slice %12 {offsets = [0, 0], sizes = [2, 32], strides = [1, 1]} : vector<2x96xf32> to vector<2x32xf32>
    %22 = vector.extract_strided_slice %20 {offsets = [0, 0], sizes = [2, 32], strides = [1, 1]} : vector<2x96xf32> to vector<2x32xf32>
    %23 = arith.addf %21, %22 : vector<2x32xf32>
    %24 = arith.negf %23 : vector<2x32xf32>
    %25 = math.exp %24 : vector<2x32xf32>
    %cst_18 = arith.constant 1.000000e+00 : f32
    %26 = vector.broadcast %cst_18 : f32 to vector<2x32xf32>
    %27 = arith.addf %26, %25 : vector<2x32xf32>
    %28 = arith.divf %26, %27 : vector<2x32xf32>
    %29 = vector.extract_strided_slice %12 {offsets = [0, 32], sizes = [2, 32], strides = [1, 1]} : vector<2x96xf32> to vector<2x32xf32>
    %30 = vector.extract_strided_slice %20 {offsets = [0, 32], sizes = [2, 32], strides = [1, 1]} : vector<2x96xf32> to vector<2x32xf32>
    %31 = arith.addf %29, %30 : vector<2x32xf32>
    %32 = arith.negf %31 : vector<2x32xf32>
    %33 = math.exp %32 : vector<2x32xf32>
    %cst_19 = arith.constant 1.000000e+00 : f32
    %34 = vector.broadcast %cst_19 : f32 to vector<2x32xf32>
    %35 = arith.addf %34, %33 : vector<2x32xf32>
    %36 = arith.divf %34, %35 : vector<2x32xf32>
    %37 = vector.extract_strided_slice %12 {offsets = [0, 64], sizes = [2, 32], strides = [1, 1]} : vector<2x96xf32> to vector<2x32xf32>
    %38 = vector.extract_strided_slice %20 {offsets = [0, 64], sizes = [2, 32], strides = [1, 1]} : vector<2x96xf32> to vector<2x32xf32>
    %39 = arith.mulf %28, %38 : vector<2x32xf32>
    %40 = arith.addf %37, %39 : vector<2x32xf32>
    %41 = math.tanh %40 : vector<2x32xf32>
    %cst_20 = arith.constant 1.000000e+00 : f32
    %42 = vector.broadcast %cst_20 : f32 to vector<2x32xf32>
    %43 = arith.subf %42, %36 : vector<2x32xf32>
    %44 = arith.mulf %43, %41 : vector<2x32xf32>
    %45 = arith.mulf %36, %5 : vector<2x32xf32>
    %46 = arith.addf %44, %45 : vector<2x32xf32>
    %c0_21 = arith.constant 0 : index
    %c0_22 = arith.constant 0 : index
    %47 = vector.load %arg8[%c0_21, %c0_22] : memref<2x32xf32, #tpu.memory_space<vmem>>, vector<2x32xf32>
    tpu.vector_store %arg8[%c0_21, %c0_22], %46 {strides = array<i32>} : memref<2x32xf32, #tpu.memory_space<vmem>>, vector<2x32xf32>,
    %c0_23 = arith.constant 0 : index
    %c0_24 = arith.constant 0 : index
    %c0_25 = arith.constant 0 : index
    %c0_26 = arith.constant 0 : index
    %48 = vector.load %arg7[%c0_23, %c0_24, %c0_25, %c0_26] : memref<1x1x2x32xf32, #tpu.memory_space<vmem>>, vector<1x1x2x32xf32>
    %49 = vector.shape_cast %48 : vector<1x1x2x32xf32> to vector<2x32xf32>
    %50 = vector.shape_cast %46 : vector<2x32xf32> to vector<1x1x2x32xf32>
    tpu.vector_store %arg7[%c0_23, %c0_24, %c0_25, %c0_26], %50 {strides = array<i32>} : memref<1x1x2x32xf32, #tpu.memory_space<vmem>>, vector<1x1x2x32xf32>,
    return
  }
  func.func @transform_0(%arg0: i32, %arg1: i32) -> (i32, i32, i32) {
    %c1_i32 = arith.constant 1 : i32
    %0 = arith.subi %c1_i32, %arg0 : i32
    %1 = arith.muli %0, %arg1 : i32
    %c7_i32 = arith.constant 7 : i32
    %2 = arith.subi %c7_i32, %arg1 : i32
    %3 = arith.muli %arg0, %2 : i32
    %4 = arith.addi %1, %3 : i32
    %c0_i32 = arith.constant 0 : i32
    %c0_i32_0 = arith.constant 0 : i32
    %c0_i32_1 = arith.constant 0 : i32
    return %4, %c0_i32, %c0_i32_0 : i32, i32, i32
  }
  func.func @transform_1(%arg0: i32, %arg1: i32) -> (i32, i32, i32) {
    %c0_i32 = arith.constant 0 : i32
    %c0_i32_0 = arith.constant 0 : i32
    %c0_i32_1 = arith.constant 0 : i32
    return %arg0, %c0_i32, %c0_i32_0 : i32, i32, i32
  }
  func.func @transform_2(%arg0: i32, %arg1: i32) -> (i32, i32, i32) {
    %c0_i32 = arith.constant 0 : i32
    %c0_i32_0 = arith.constant 0 : i32
    %c0_i32_1 = arith.constant 0 : i32
    return %arg0, %c0_i32, %c0_i32_0 : i32, i32, i32
  }
  func.func @transform_3(%arg0: i32, %arg1: i32) -> (i32, i32, i32) {
    %c0_i32 = arith.constant 0 : i32
    %c0_i32_0 = arith.constant 0 : i32
    %c0_i32_1 = arith.constant 0 : i32
    return %arg0, %c0_i32, %c0_i32_0 : i32, i32, i32
  }
  func.func @transform_4(%arg0: i32, %arg1: i32) -> (i32, i32, i32) {
    %c0_i32 = arith.constant 0 : i32
    %c0_i32_0 = arith.constant 0 : i32
    %c0_i32_1 = arith.constant 0 : i32
    return %arg0, %c0_i32, %c0_i32_0 : i32, i32, i32
  }
  func.func @transform_5(%arg0: i32, %arg1: i32) -> (i32, i32, i32, i32) {
    %c1_i32 = arith.constant 1 : i32
    %0 = arith.subi %c1_i32, %arg0 : i32
    %1 = arith.muli %0, %arg1 : i32
    %c7_i32 = arith.constant 7 : i32
    %2 = arith.subi %c7_i32, %arg1 : i32
    %3 = arith.muli %arg0, %2 : i32
    %4 = arith.addi %1, %3 : i32
    %c0_i32 = arith.constant 0 : i32
    %c0_i32_0 = arith.constant 0 : i32
    %c0_i32_1 = arith.constant 0 : i32
    return %arg0, %4, %c0_i32, %c0_i32_0 : i32, i32, i32, i32
  }
}

module attributes {stable_mosaic.version = 11 : i64} {
  func.func @decoder_kernel(%arg0: i32, %arg1: memref<6xi32, #tpu.memory_space<smem>>, %arg2: memref<6x2x1xi32, #tpu.memory_space<vmem>>, %arg3: memref<2x16xf32, #tpu.memory_space<vmem>>, %arg4: memref<2x32xf32, #tpu.memory_space<vmem>>, %arg5: memref<8x2x32xf32, #tpu.memory_space<vmem>>, %arg6: memref<8x2x32xf32, #tpu.memory_space<vmem>>, %arg7: memref<32x16xbf16, #tpu.memory_space<vmem>>, %arg8: memref<32x32xbf16, #tpu.memory_space<vmem>>, %arg9: memref<1x1x32xf32, #tpu.memory_space<vmem>>, %arg10: memref<48x96xbf16, #tpu.memory_space<vmem>>, %arg11: memref<32x96xbf16, #tpu.memory_space<vmem>>, %arg12: memref<1x96xf32, #tpu.memory_space<vmem>>, %arg13: memref<1x96xf32, #tpu.memory_space<vmem>>, %arg14: memref<64x32xbf16, #tpu.memory_space<vmem>>, %arg15: memref<1x32xf32, #tpu.memory_space<vmem>>, %arg16: memref<1x2x32xf32, #tpu.memory_space<vmem>>, %arg17: memref<2x32xf32, #tpu.memory_space<vmem>>, %arg18: memref<2x16xf32, #tpu.memory_space<vmem>>) attributes {dimension_semantics = [#tpu.dimension_semantics<arbitrary>], iteration_bounds = array<i64: 6>, scalar_prefetch = 1 : i64, scratch_operands = 2 : i64, tpu.core_type = #tpu.core_type<tc>, window_params = [{pipeline_mode = #tpu.pipeline_mode<synchronous>, transform_indices = @transform_0, window_bounds = array<i64: 6, 2, 1>}, {pipeline_mode = #tpu.pipeline_mode<synchronous>, transform_indices = @transform_1, window_bounds = array<i64: 2, 16>}, {pipeline_mode = #tpu.pipeline_mode<synchronous>, transform_indices = @transform_2, window_bounds = array<i64: 2, 32>}, {pipeline_mode = #tpu.pipeline_mode<synchronous>, transform_indices = @transform_3, window_bounds = array<i64: 8, 2, 32>}, {pipeline_mode = #tpu.pipeline_mode<synchronous>, transform_indices = @transform_4, window_bounds = array<i64: 8, 2, 32>}, {pipeline_mode = #tpu.pipeline_mode<synchronous>, transform_indices = @transform_5, window_bounds = array<i64: 32, 16>}, {pipeline_mode = #tpu.pipeline_mode<synchronous>, transform_indices = @transform_6, window_bounds = array<i64: 32, 32>}, {pipeline_mode = #tpu.pipeline_mode<synchronous>, transform_indices = @transform_7, window_bounds = array<i64: 1, 1, 32>}, {pipeline_mode = #tpu.pipeline_mode<synchronous>, transform_indices = @transform_8, window_bounds = array<i64: 48, 96>}, {pipeline_mode = #tpu.pipeline_mode<synchronous>, transform_indices = @transform_9, window_bounds = array<i64: 32, 96>}, {pipeline_mode = #tpu.pipeline_mode<synchronous>, transform_indices = @transform_10, window_bounds = array<i64: 1, 96>}, {pipeline_mode = #tpu.pipeline_mode<synchronous>, transform_indices = @transform_11, window_bounds = array<i64: 1, 96>}, {pipeline_mode = #tpu.pipeline_mode<synchronous>, transform_indices = @transform_12, window_bounds = array<i64: 64, 32>}, {pipeline_mode = #tpu.pipeline_mode<synchronous>, transform_indices = @transform_13, window_bounds = array<i64: 1, 32>}, {transform_indices = @transform_14, window_bounds = array<i64: 1, 2, 32>}]} {
    %c0_i32 = arith.constant 0 : i32
    %0 = arith.cmpi eq, %arg0, %c0_i32 : i32
    %1 = arith.extui %0 : i1 to i32
    %c0_i32_0 = arith.constant 0 : i32
    %2 = arith.cmpi ne, %1, %c0_i32_0 : i32
    scf.if %2 {
      %c0_53 = arith.constant 0 : index
      %c0_54 = arith.constant 0 : index
      %106 = vector.load %arg4[%c0_53, %c0_54] : memref<2x32xf32, #tpu.memory_space<vmem>>, vector<2x32xf32>
      %c0_55 = arith.constant 0 : index
      %c0_56 = arith.constant 0 : index
      %107 = vector.load %arg17[%c0_55, %c0_56] : memref<2x32xf32, #tpu.memory_space<vmem>>, vector<2x32xf32>
      tpu.vector_store %arg17[%c0_55, %c0_56], %106 {strides = array<i32>} : memref<2x32xf32, #tpu.memory_space<vmem>>, vector<2x32xf32>,
      %c0_57 = arith.constant 0 : index
      %c0_58 = arith.constant 0 : index
      %108 = vector.load %arg3[%c0_57, %c0_58] : memref<2x16xf32, #tpu.memory_space<vmem>>, vector<2x16xf32>
      %c0_59 = arith.constant 0 : index
      %c0_60 = arith.constant 0 : index
      %109 = vector.load %arg18[%c0_59, %c0_60] : memref<2x16xf32, #tpu.memory_space<vmem>>, vector<2x16xf32>
      tpu.vector_store %arg18[%c0_59, %c0_60], %108 {strides = array<i32>} : memref<2x16xf32, #tpu.memory_space<vmem>>, vector<2x16xf32>,
    } else {
    }
    %c0 = arith.constant 0 : index
    %c0_1 = arith.constant 0 : index
    %3 = vector.load %arg17[%c0, %c0_1] : memref<2x32xf32, #tpu.memory_space<vmem>>, vector<2x32xf32>
    %c0_2 = arith.constant 0 : index
    %c0_3 = arith.constant 0 : index
    %4 = vector.load %arg18[%c0_2, %c0_3] : memref<2x16xf32, #tpu.memory_space<vmem>>, vector<2x16xf32>
    %5 = arith.truncf %3 : vector<2x32xf32> to vector<2x32xbf16>
    %c0_4 = arith.constant 0 : index
    %c0_5 = arith.constant 0 : index
    %6 = vector.load %arg8[%c0_4, %c0_5] : memref<32x32xbf16, #tpu.memory_space<vmem>>, vector<32x32xbf16>
    %cst = arith.constant dense<0.000000e+00> : vector<2x32xf32>
    %7 = tpu.matmul %5, %6, %cst {dimension_numbers = #tpu.dot_dimension_numbers<[1], [0], [0], [1], [0, 0, 1, 1], [], []>} : vector<2x32xbf16>, vector<32x32xbf16>, vector<2x32xf32> -> vector<2x32xf32>
    %c0_6 = arith.constant 0 : index
    %c0_7 = arith.constant 0 : index
    %c0_8 = arith.constant 0 : index
    %8 = vector.load %arg6[%c0_6, %c0_7, %c0_8] : memref<8x2x32xf32, #tpu.memory_space<vmem>>, vector<8x2x32xf32>
    %9 = vector.shape_cast %7 : vector<2x32xf32> to vector<1x2x32xf32>
    %10 = vector.broadcast %9 : vector<1x2x32xf32> to vector<8x2x32xf32>
    %11 = arith.addf %8, %10 : vector<8x2x32xf32>
    %cst_9 = arith.constant 0.000000e+00 : f32
    %12 = vector.broadcast %cst_9 : f32 to vector<8x2x32xf32>
    %13 = arith.maximumf %11, %12 : vector<8x2x32xf32>
    %c0_10 = arith.constant 0 : index
    %c0_11 = arith.constant 0 : index
    %c0_12 = arith.constant 0 : index
    %14 = vector.load %arg9[%c0_10, %c0_11, %c0_12] : memref<1x1x32xf32, #tpu.memory_space<vmem>>, vector<1x1x32xf32>
    %15 = vector.broadcast %14 : vector<1x1x32xf32> to vector<8x2x32xf32>
    %16 = arith.mulf %13, %15 : vector<8x2x32xf32>
    %cst_13 = arith.constant dense<0.000000e+00> : vector<8x2xf32>
    %17 = vector.multi_reduction <add>, %16, %cst_13 [2] : vector<8x2x32xf32> to vector<8x2xf32>
    %18 = vector.shape_cast %17 : vector<8x2xf32> to vector<8x2x1xf32>
    %cst_14 = arith.constant dense<0xFF800000> : vector<2x1xf32>
    %19 = vector.multi_reduction <maximumf>, %18, %cst_14 [0] : vector<8x2x1xf32> to vector<2x1xf32>
    %20 = vector.shape_cast %19 : vector<2x1xf32> to vector<1x2x1xf32>
    %21 = vector.broadcast %20 : vector<1x2x1xf32> to vector<8x2x1xf32>
    %22 = arith.subf %18, %21 : vector<8x2x1xf32>
    %23 = math.exp %22 : vector<8x2x1xf32>
    %cst_15 = arith.constant dense<0.000000e+00> : vector<2x1xf32>
    %24 = vector.multi_reduction <add>, %23, %cst_15 [0] : vector<8x2x1xf32> to vector<2x1xf32>
    %25 = vector.shape_cast %24 : vector<2x1xf32> to vector<1x2x1xf32>
    %26 = tpu.reciprocal %25 {approx = true} : vector<1x2x1xf32> -> vector<1x2x1xf32>
    %27 = vector.broadcast %26 : vector<1x2x1xf32> to vector<8x2x1xf32>
    %28 = arith.mulf %23, %27 : vector<8x2x1xf32>
    %c0_16 = arith.constant 0 : index
    %c0_17 = arith.constant 0 : index
    %c0_18 = arith.constant 0 : index
    %29 = vector.load %arg5[%c0_16, %c0_17, %c0_18] : memref<8x2x32xf32, #tpu.memory_space<vmem>>, vector<8x2x32xf32>
    %30 = vector.broadcast %28 : vector<8x2x1xf32> to vector<8x2x32xf32>
    %31 = arith.mulf %30, %29 : vector<8x2x32xf32>
    %cst_19 = arith.constant dense<0.000000e+00> : vector<2x32xf32>
    %32 = vector.multi_reduction <add>, %31, %cst_19 [0] : vector<8x2x32xf32> to vector<2x32xf32>
    %33 = tpu.concatenate %4, %32 in 1 : vector<2x16xf32>, vector<2x32xf32> -> vector<2x48xf32>
    %34 = arith.truncf %33 : vector<2x48xf32> to vector<2x48xbf16>
    %c0_20 = arith.constant 0 : index
    %c0_21 = arith.constant 0 : index
    %35 = vector.load %arg10[%c0_20, %c0_21] : memref<48x96xbf16, #tpu.memory_space<vmem>>, vector<48x96xbf16>
    %cst_22 = arith.constant dense<0.000000e+00> : vector<2x96xf32>
    %36 = tpu.matmul %34, %35, %cst_22 {dimension_numbers = #tpu.dot_dimension_numbers<[1], [0], [0], [1], [0, 0, 1, 1], [], []>} : vector<2x48xbf16>, vector<48x96xbf16>, vector<2x96xf32> -> vector<2x96xf32>
    %c0_23 = arith.constant 0 : index
    %c0_24 = arith.constant 0 : index
    %37 = vector.load %arg12[%c0_23, %c0_24] : memref<1x96xf32, #tpu.memory_space<vmem>>, vector<1x96xf32>
    %38 = vector.broadcast %37 : vector<1x96xf32> to vector<2x96xf32>
    %39 = arith.addf %36, %38 : vector<2x96xf32>
    %c0_25 = arith.constant 0 : index
    %c0_26 = arith.constant 0 : index
    %40 = vector.load %arg11[%c0_25, %c0_26] : memref<32x96xbf16, #tpu.memory_space<vmem>>, vector<32x96xbf16>
    %cst_27 = arith.constant dense<0.000000e+00> : vector<2x96xf32>
    %41 = tpu.matmul %5, %40, %cst_27 {dimension_numbers = #tpu.dot_dimension_numbers<[1], [0], [0], [1], [0, 0, 1, 1], [], []>} : vector<2x32xbf16>, vector<32x96xbf16>, vector<2x96xf32> -> vector<2x96xf32>
    %c0_28 = arith.constant 0 : index
    %c0_29 = arith.constant 0 : index
    %42 = vector.load %arg13[%c0_28, %c0_29] : memref<1x96xf32, #tpu.memory_space<vmem>>, vector<1x96xf32>
    %43 = vector.broadcast %42 : vector<1x96xf32> to vector<2x96xf32>
    %44 = arith.addf %41, %43 : vector<2x96xf32>
    %45 = vector.extract_strided_slice %39 {offsets = [0, 0], sizes = [2, 32], strides = [1, 1]} : vector<2x96xf32> to vector<2x32xf32>
    %46 = vector.extract_strided_slice %44 {offsets = [0, 0], sizes = [2, 32], strides = [1, 1]} : vector<2x96xf32> to vector<2x32xf32>
    %47 = arith.addf %45, %46 : vector<2x32xf32>
    %48 = arith.negf %47 : vector<2x32xf32>
    %49 = math.exp %48 : vector<2x32xf32>
    %cst_30 = arith.constant 1.000000e+00 : f32
    %50 = vector.broadcast %cst_30 : f32 to vector<2x32xf32>
    %51 = arith.addf %50, %49 : vector<2x32xf32>
    %52 = arith.divf %50, %51 : vector<2x32xf32>
    %53 = vector.extract_strided_slice %39 {offsets = [0, 32], sizes = [2, 32], strides = [1, 1]} : vector<2x96xf32> to vector<2x32xf32>
    %54 = vector.extract_strided_slice %44 {offsets = [0, 32], sizes = [2, 32], strides = [1, 1]} : vector<2x96xf32> to vector<2x32xf32>
    %55 = arith.addf %53, %54 : vector<2x32xf32>
    %56 = arith.negf %55 : vector<2x32xf32>
    %57 = math.exp %56 : vector<2x32xf32>
    %cst_31 = arith.constant 1.000000e+00 : f32
    %58 = vector.broadcast %cst_31 : f32 to vector<2x32xf32>
    %59 = arith.addf %58, %57 : vector<2x32xf32>
    %60 = arith.divf %58, %59 : vector<2x32xf32>
    %61 = vector.extract_strided_slice %39 {offsets = [0, 64], sizes = [2, 32], strides = [1, 1]} : vector<2x96xf32> to vector<2x32xf32>
    %62 = vector.extract_strided_slice %44 {offsets = [0, 64], sizes = [2, 32], strides = [1, 1]} : vector<2x96xf32> to vector<2x32xf32>
    %63 = arith.mulf %52, %62 : vector<2x32xf32>
    %64 = arith.addf %61, %63 : vector<2x32xf32>
    %65 = math.tanh %64 : vector<2x32xf32>
    %cst_32 = arith.constant 1.000000e+00 : f32
    %66 = vector.broadcast %cst_32 : f32 to vector<2x32xf32>
    %67 = arith.subf %66, %60 : vector<2x32xf32>
    %68 = arith.mulf %67, %65 : vector<2x32xf32>
    %69 = arith.mulf %60, %3 : vector<2x32xf32>
    %70 = arith.addf %68, %69 : vector<2x32xf32>
    %71 = tpu.concatenate %70, %32 in 1 : vector<2x32xf32>, vector<2x32xf32> -> vector<2x64xf32>
    %72 = arith.truncf %71 : vector<2x64xf32> to vector<2x64xbf16>
    %c0_33 = arith.constant 0 : index
    %c0_34 = arith.constant 0 : index
    %73 = vector.load %arg14[%c0_33, %c0_34] : memref<64x32xbf16, #tpu.memory_space<vmem>>, vector<64x32xbf16>
    %cst_35 = arith.constant dense<0.000000e+00> : vector<2x32xf32>
    %74 = tpu.matmul %72, %73, %cst_35 {dimension_numbers = #tpu.dot_dimension_numbers<[1], [0], [0], [1], [0, 0, 1, 1], [], []>} : vector<2x64xbf16>, vector<64x32xbf16>, vector<2x32xf32> -> vector<2x32xf32>
    %c0_36 = arith.constant 0 : index
    %c0_37 = arith.constant 0 : index
    %75 = vector.load %arg15[%c0_36, %c0_37] : memref<1x32xf32, #tpu.memory_space<vmem>>, vector<1x32xf32>
    %76 = vector.broadcast %75 : vector<1x32xf32> to vector<2x32xf32>
    %77 = arith.addf %74, %76 : vector<2x32xf32>
    %c0_38 = arith.constant 0 : index
    %c0_39 = arith.constant 0 : index
    %c0_40 = arith.constant 0 : index
    %78 = vector.load %arg16[%c0_38, %c0_39, %c0_40] : memref<1x2x32xf32, #tpu.memory_space<vmem>>, vector<1x2x32xf32>
    %79 = vector.shape_cast %78 : vector<1x2x32xf32> to vector<2x32xf32>
    %80 = vector.shape_cast %77 : vector<2x32xf32> to vector<1x2x32xf32>
    tpu.vector_store %arg16[%c0_38, %c0_39, %c0_40], %80 {strides = array<i32>} : memref<1x2x32xf32, #tpu.memory_space<vmem>>, vector<1x2x32xf32>,
    %81 = tpu.iota {dimensions = array<i32: 1>} : vector<2x32xi32>
    %cst_41 = arith.constant dense<0xFF800000> : vector<2xf32>
    %82 = vector.multi_reduction <maximumf>, %77, %cst_41 [1] : vector<2x32xf32> to vector<2xf32>
    %83 = vector.shape_cast %82 : vector<2xf32> to vector<2x1xf32>
    %84 = vector.broadcast %83 : vector<2x1xf32> to vector<2x32xf32>
    %85 = arith.cmpf oge, %77, %84 : vector<2x32xf32>
    %c32_i32 = arith.constant 32 : i32
    %86 = vector.broadcast %c32_i32 : i32 to vector<2x32xi32>
    %87 = arith.select %85, %81, %86 : vector<2x32xi1>, vector<2x32xi32>
    %cst_42 = arith.constant dense<2147483647> : vector<2xi32>
    %88 = vector.multi_reduction <minsi>, %87, %cst_42 [1] : vector<2x32xi32> to vector<2xi32>
    %89 = vector.shape_cast %88 : vector<2xi32> to vector<2x1xi32>
    %90 = arith.index_cast %arg0 : i32 to index
    %91 = memref.load %arg1[%90] : memref<6xi32, #tpu.memory_space<smem>>
    %92 = arith.index_cast %arg0 : i32 to index
    %c0_43 = arith.constant 0 : index
    %c0_44 = arith.constant 0 : index
    %93 = vector.load %arg2[%92, %c0_43, %c0_44] : memref<6x2x1xi32, #tpu.memory_space<vmem>>, vector<1x2x1xi32>
    %94 = vector.shape_cast %93 : vector<1x2x1xi32> to vector<2x1xi32>
    %c0_i32_45 = arith.constant 0 : i32
    %95 = arith.cmpi sgt, %91, %c0_i32_45 : i32
    %96 = arith.select %95, %94, %89 : vector<2x1xi32>
    %97 = vector.broadcast %96 : vector<2x1xi32> to vector<2x32xi32>
    %98 = arith.cmpi eq, %81, %97 : vector<2x32xi32>
    %99 = arith.extui %98 : vector<2x32xi1> to vector<2x32xi32>
    %100 = arith.sitofp %99 : vector<2x32xi32> to vector<2x32xf32>
    %101 = arith.truncf %100 : vector<2x32xf32> to vector<2x32xbf16>
    %c0_46 = arith.constant 0 : index
    %c0_47 = arith.constant 0 : index
    %102 = vector.load %arg7[%c0_46, %c0_47] : memref<32x16xbf16, #tpu.memory_space<vmem>>, vector<32x16xbf16>
    %cst_48 = arith.constant dense<0.000000e+00> : vector<2x16xf32>
    %103 = tpu.matmul %101, %102, %cst_48 {dimension_numbers = #tpu.dot_dimension_numbers<[1], [0], [0], [1], [0, 0, 1, 1], [], []>} : vector<2x32xbf16>, vector<32x16xbf16>, vector<2x16xf32> -> vector<2x16xf32>
    %c0_49 = arith.constant 0 : index
    %c0_50 = arith.constant 0 : index
    %104 = vector.load %arg18[%c0_49, %c0_50] : memref<2x16xf32, #tpu.memory_space<vmem>>, vector<2x16xf32>
    tpu.vector_store %arg18[%c0_49, %c0_50], %103 {strides = array<i32>} : memref<2x16xf32, #tpu.memory_space<vmem>>, vector<2x16xf32>,
    %c0_51 = arith.constant 0 : index
    %c0_52 = arith.constant 0 : index
    %105 = vector.load %arg17[%c0_51, %c0_52] : memref<2x32xf32, #tpu.memory_space<vmem>>, vector<2x32xf32>
    tpu.vector_store %arg17[%c0_51, %c0_52], %70 {strides = array<i32>} : memref<2x32xf32, #tpu.memory_space<vmem>>, vector<2x32xf32>,
    return
  }
  func.func @transform_0(%arg0: i32, %arg1: memref<6xi32, #tpu.memory_space<smem>>) -> (i32, i32, i32) {
    %c0_i32 = arith.constant 0 : i32
    %c0_i32_0 = arith.constant 0 : i32
    %c0_i32_1 = arith.constant 0 : i32
    %c0_i32_2 = arith.constant 0 : i32
    return %c0_i32, %c0_i32_0, %c0_i32_1 : i32, i32, i32
  }
  func.func @transform_1(%arg0: i32, %arg1: memref<6xi32, #tpu.memory_space<smem>>) -> (i32, i32) {
    %c0_i32 = arith.constant 0 : i32
    %c0_i32_0 = arith.constant 0 : i32
    %c0_i32_1 = arith.constant 0 : i32
    return %c0_i32, %c0_i32_0 : i32, i32
  }
  func.func @transform_2(%arg0: i32, %arg1: memref<6xi32, #tpu.memory_space<smem>>) -> (i32, i32) {
    %c0_i32 = arith.constant 0 : i32
    %c0_i32_0 = arith.constant 0 : i32
    %c0_i32_1 = arith.constant 0 : i32
    return %c0_i32, %c0_i32_0 : i32, i32
  }
  func.func @transform_3(%arg0: i32, %arg1: memref<6xi32, #tpu.memory_space<smem>>) -> (i32, i32, i32) {
    %c0_i32 = arith.constant 0 : i32
    %c0_i32_0 = arith.constant 0 : i32
    %c0_i32_1 = arith.constant 0 : i32
    %c0_i32_2 = arith.constant 0 : i32
    return %c0_i32, %c0_i32_0, %c0_i32_1 : i32, i32, i32
  }
  func.func @transform_4(%arg0: i32, %arg1: memref<6xi32, #tpu.memory_space<smem>>) -> (i32, i32, i32) {
    %c0_i32 = arith.constant 0 : i32
    %c0_i32_0 = arith.constant 0 : i32
    %c0_i32_1 = arith.constant 0 : i32
    %c0_i32_2 = arith.constant 0 : i32
    return %c0_i32, %c0_i32_0, %c0_i32_1 : i32, i32, i32
  }
  func.func @transform_5(%arg0: i32, %arg1: memref<6xi32, #tpu.memory_space<smem>>) -> (i32, i32) {
    %c0_i32 = arith.constant 0 : i32
    %c0_i32_0 = arith.constant 0 : i32
    %c0_i32_1 = arith.constant 0 : i32
    return %c0_i32, %c0_i32_0 : i32, i32
  }
  func.func @transform_6(%arg0: i32, %arg1: memref<6xi32, #tpu.memory_space<smem>>) -> (i32, i32) {
    %c0_i32 = arith.constant 0 : i32
    %c0_i32_0 = arith.constant 0 : i32
    %c0_i32_1 = arith.constant 0 : i32
    return %c0_i32, %c0_i32_0 : i32, i32
  }
  func.func @transform_7(%arg0: i32, %arg1: memref<6xi32, #tpu.memory_space<smem>>) -> (i32, i32, i32) {
    %c0_i32 = arith.constant 0 : i32
    %c0_i32_0 = arith.constant 0 : i32
    %c0_i32_1 = arith.constant 0 : i32
    %c0_i32_2 = arith.constant 0 : i32
    return %c0_i32, %c0_i32_0, %c0_i32_1 : i32, i32, i32
  }
  func.func @transform_8(%arg0: i32, %arg1: memref<6xi32, #tpu.memory_space<smem>>) -> (i32, i32) {
    %c0_i32 = arith.constant 0 : i32
    %c0_i32_0 = arith.constant 0 : i32
    %c0_i32_1 = arith.constant 0 : i32
    return %c0_i32, %c0_i32_0 : i32, i32
  }
  func.func @transform_9(%arg0: i32, %arg1: memref<6xi32, #tpu.memory_space<smem>>) -> (i32, i32) {
    %c0_i32 = arith.constant 0 : i32
    %c0_i32_0 = arith.constant 0 : i32
    %c0_i32_1 = arith.constant 0 : i32
    return %c0_i32, %c0_i32_0 : i32, i32
  }
  func.func @transform_10(%arg0: i32, %arg1: memref<6xi32, #tpu.memory_space<smem>>) -> (i32, i32) {
    %c0_i32 = arith.constant 0 : i32
    %c0_i32_0 = arith.constant 0 : i32
    %c0_i32_1 = arith.constant 0 : i32
    return %c0_i32, %c0_i32_0 : i32, i32
  }
  func.func @transform_11(%arg0: i32, %arg1: memref<6xi32, #tpu.memory_space<smem>>) -> (i32, i32) {
    %c0_i32 = arith.constant 0 : i32
    %c0_i32_0 = arith.constant 0 : i32
    %c0_i32_1 = arith.constant 0 : i32
    return %c0_i32, %c0_i32_0 : i32, i32
  }
  func.func @transform_12(%arg0: i32, %arg1: memref<6xi32, #tpu.memory_space<smem>>) -> (i32, i32) {
    %c0_i32 = arith.constant 0 : i32
    %c0_i32_0 = arith.constant 0 : i32
    %c0_i32_1 = arith.constant 0 : i32
    return %c0_i32, %c0_i32_0 : i32, i32
  }
  func.func @transform_13(%arg0: i32, %arg1: memref<6xi32, #tpu.memory_space<smem>>) -> (i32, i32) {
    %c0_i32 = arith.constant 0 : i32
    %c0_i32_0 = arith.constant 0 : i32
    %c0_i32_1 = arith.constant 0 : i32
    return %c0_i32, %c0_i32_0 : i32, i32
  }
  func.func @transform_14(%arg0: i32, %arg1: memref<6xi32, #tpu.memory_space<smem>>) -> (i32, i32, i32) {
    %c0_i32 = arith.constant 0 : i32
    %c0_i32_0 = arith.constant 0 : i32
    %c0_i32_1 = arith.constant 0 : i32
    return %arg0, %c0_i32, %c0_i32_0 : i32, i32, i32
  }
}

</mosaic_0001>

<llo_original>
// kernel: seq2seq_forward.4
$region0: #{seq2seq_forward.4}
  #allocation0 [shape = 'u32[]', space=smem, size = 0x4, offset = 0x4, fixed_abs, tag = 'smem constant byte address 0x4 - core index']
  #allocation1 [shape = 'u32[144,128]{1,0:T(1,128)}', space=vmem, size = 0x12000, scoped, tag = 'internal scratch']
  %s0 = inlined_call_operand.vmem [shape: f32[2,8,2,32], index: 0, kind: input, shape index: {}]
  %s1 = inlined_call_operand.vmem [shape: bf16[32,32], index: 1, kind: input, shape index: {}]
  %s2 = inlined_call_operand.vmem [shape: f32[1,32], index: 2, kind: input, shape index: {}]
  %s3 = inlined_call_operand.vmem [shape: f32[8,2,32], index: 3, kind: output, shape index: {0}]
  %s4 = inlined_call_operand.vmem [shape: f32[8,2,32], index: 4, kind: output, shape index: {1}]
  %5 = xla_tuple %s3, %s4
  %s6 = sld [smem:[#allocation0]]
  $region87: #{seq2seq_forward.4} parent=0
    _
  %s8 = ssub.s32 1, %s6
  %s9 = scalar_select 0, %s8, %s6
  $region1: #{seq2seq_forward.4} parent=0
    #allocation2 [shape = 'u8[4096]{0}', space=vmem, size = 0x1000, scoped, tag = 'input window, operand 0']
    loop: start=0, step=1, limit=10
    $region2: #{seq2seq_forward.4} parent=1 // loop_pre_header
      _
    $region3: #{seq2seq_forward.4} parent=1 // loop_header
      %s11 = sphi 0, %s15
      %p12 = scmp.ge.s32.totalorder %s11, 10
      %s21 = sphi 0, %s23
      %s24 = sphi 0, %s21
      %s25 = sphi 0, %s24
      %s41 = sphi 0, %s25
      %s45 = sphi 0, %s45
      %s47 = sphi 0, %s45
      %s48 = sphi 0, %s47
      %s62 = sphi 0, %s48
      %s66 = sphi 0, %s66
      %s68 = sphi 0, %s66
      %s69 = sphi 0, %s68
      %s83 = sphi 0, %s69
      %s89 = sphi 0, %s91
      %s92 = sphi 0, %s89
      %s93 = sphi 0, %s92
      %s109 = sphi 0, %s93
      %s115 = sphi 0, %s117
      %s118 = sphi 0, %s115
      %s119 = sphi 0, %s118
      %s135 = sphi 0, %s119
    $region4: #{seq2seq_forward.4} parent=1 // loop_header_branch
      %14 = sbr.rel (%p12) target = $region8
    $region5: #{seq2seq_forward.4} parent=1 // loop_body
      %s16 = ssub.s32 %s11, 1
      %s17 = ssub.s32 %s11, 2
      %s18 = sadd.s32 %s11, 1
      %s19 = ssub.s32 %s11, %s18
      %p20 = scmp.eq.s32.totalorder %s19, 0
      %s22 = sadd.s32 %s21, 1
      %s23 = scalar_select %p20, %s21, %s22
      %p26 = pneg %p20
      %p27 = scmp.eq.s32.totalorder %s11, 7
      %p28 = por %p26, %p27
      %p29 = scmp.ne.s32.totalorder %s21, %s24
      %p30 = scmp.eq.s32.totalorder %s11, 0
      %p31 = por %p29, %p30
      %p32 = scmp.ne.s32.totalorder %s21, %s24
      %p33 = scmp.eq.s32.totalorder %s16, 7
      %p34 = por %p32, %p33
      %p35 = scmp.ne.s32.totalorder %s24, %s25
      %p36 = scmp.eq.s32.totalorder %s16, 0
      %p37 = por %p35, %p36
      %p38 = scmp.ne.s32.totalorder %s24, %s25
      %p39 = scmp.eq.s32.totalorder %s17, 7
      %p40 = por %p38, %p39
      %p42 = scmp.ne.s32.totalorder %s25, %s41
      %p43 = scmp.eq.s32.totalorder %s17, 0
      %p44 = por %p42, %p43
      %s46 = sadd.s32 %s45, 1
      %p49 = scmp.eq.s32.totalorder %s11, 7
      %p50 = scmp.ne.s32.totalorder %s45, %s47
      %p51 = scmp.eq.s32.totalorder %s11, 0
      %p52 = por %p50, %p51
      %p53 = scmp.ne.s32.totalorder %s45, %s47
      %p54 = scmp.eq.s32.totalorder %s16, 7
      %p55 = por %p53, %p54
      %p56 = scmp.ne.s32.totalorder %s47, %s48
      %p57 = scmp.eq.s32.totalorder %s16, 0
      %p58 = por %p56, %p57
      %p59 = scmp.ne.s32.totalorder %s47, %s48
      %p60 = scmp.eq.s32.totalorder %s17, 7
      %p61 = por %p59, %p60
      %p63 = scmp.ne.s32.totalorder %s48, %s62
      %p64 = scmp.eq.s32.totalorder %s17, 0
      %p65 = por %p63, %p64
      %s67 = sadd.s32 %s66, 1
      %p70 = scmp.eq.s32.totalorder %s11, 7
      %p71 = scmp.ne.s32.totalorder %s66, %s68
      %p72 = scmp.eq.s32.totalorder %s11, 0
      %p73 = por %p71, %p72
      %p74 = scmp.ne.s32.totalorder %s66, %s68
      %p75 = scmp.eq.s32.totalorder %s16, 7
      %p76 = por %p74, %p75
      %p77 = scmp.ne.s32.totalorder %s68, %s69
      %p78 = scmp.eq.s32.totalorder %s16, 0
      %p79 = por %p77, %p78
      %p80 = scmp.ne.s32.totalorder %s68, %s69
      %p81 = scmp.eq.s32.totalorder %s17, 7
      %p82 = por %p80, %p81
      %p84 = scmp.ne.s32.totalorder %s69, %s83
      %p85 = scmp.eq.s32.totalorder %s17, 0
      %p86 = por %p84, %p85
      %s87 = ssub.s32 %s11, %s18
      %p88 = scmp.eq.s32.totalorder %s87, 0
      %s90 = sadd.s32 %s89, 1
      %s91 = scalar_select %p88, %s89, %s90
      %p94 = pneg %p88
      %p95 = scmp.eq.s32.totalorder %s11, 7
      %p96 = por %p94, %p95
      %p97 = scmp.ne.s32.totalorder %s89, %s92
      %p98 = scmp.eq.s32.totalorder %s11, 0
      %p99 = por %p97, %p98
      %p100 = scmp.ne.s32.totalorder %s89, %s92
      %p101 = scmp.eq.s32.totalorder %s16, 7
      %p102 = por %p100, %p101
      %p103 = scmp.ne.s32.totalorder %s92, %s93
      %p104 = scmp.eq.s32.totalorder %s16, 0
      %p105 = por %p103, %p104
      %p106 = scmp.ne.s32.totalorder %s92, %s93
      %p107 = scmp.eq.s32.totalorder %s17, 7
      %p108 = por %p106, %p107
      %p110 = scmp.ne.s32.totalorder %s93, %s109
      %p111 = scmp.eq.s32.totalorder %s17, 0
      %p112 = por %p110, %p111
      %s113 = ssub.s32 %s11, %s18
      %p114 = scmp.eq.s32.totalorder %s113, 0
      %s116 = sadd.s32 %s115, 1
      %s117 = scalar_select %p114, %s115, %s116
      %p120 = pneg %p114
      %p121 = scmp.eq.s32.totalorder %s11, 7
      %p122 = por %p120, %p121
      %p123 = scmp.ne.s32.totalorder %s115, %s118
      %p124 = scmp.eq.s32.totalorder %s11, 0
      %p125 = por %p123, %p124
      %p126 = scmp.ne.s32.totalorder %s115, %s118
      %p127 = scmp.eq.s32.totalorder %s16, 7
      %p128 = por %p126, %p127
      %p129 = scmp.ne.s32.totalorder %s118, %s119
      %p130 = scmp.eq.s32.totalorder %s16, 0
      %p131 = por %p129, %p130
      %p132 = scmp.ne.s32.totalorder %s118, %s119
      %p133 = scmp.eq.s32.totalorder %s17, 7
      %p134 = por %p132, %p133
      %p136 = scmp.ne.s32.totalorder %s119, %s135
      %p137 = scmp.eq.s32.totalorder %s17, 0
      %p138 = por %p136, %p137
      %p139 = scmp.le.s32.totalorder 1, %s11
      %p140 = scmp.lt.s32.totalorder %s11, 9
      %p141 = pnand %p139, %p140
      %p142 = pneg %p141
      // Predicated region
      $region9: #{seq2seq_forward.4} parent=5 // pred_check
        _
      $region10: #{seq2seq_forward.4} parent=5 // pred_check_branch
        %144 = sbr.rel (%p141) target = $region12
      $region11: #{seq2seq_forward.4} parent=5 // pred_region
        %s145 = ssub.s32 %s11, 1
        // Predicated region
        $region13: #{seq2seq_forward.4} parent=11 // pred_check
          %p146 = pneg %p58
        $region14: #{seq2seq_forward.4} parent=11 // pred_check_branch
          %148 = sbr.rel (%p146) target = $region16
        $region15: #{seq2seq_forward.4} parent=11 // pred_region
          _
        $region16: #{seq2seq_forward.4} parent=11 // pred_fallthru
          _
        // Predicated region
        $region17: #{seq2seq_forward.4} parent=11 // pred_check
          %p149 = pneg %p79
        $region18: #{seq2seq_forward.4} parent=11 // pred_check_branch
          %151 = sbr.rel (%p149) target = $region20
        $region19: #{seq2seq_forward.4} parent=11 // pred_region
          _
        $region20: #{seq2seq_forward.4} parent=11 // pred_fallthru
          _
      $region12: #{seq2seq_forward.4} parent=5 // pred_fallthru
        _
      %p152 = scmp.lt.s32.totalorder %s11, 8
      // Predicated region
      $region21: #{seq2seq_forward.4} parent=5 // pred_check
        %p153 = pneg %p152
      $region22: #{seq2seq_forward.4} parent=5 // pred_check_branch
        %155 = sbr.rel (%p153) target = $region24
      $region23: #{seq2seq_forward.4} parent=5 // pred_region
        // Predicated region
        $region25: #{seq2seq_forward.4} parent=23 // pred_check
          %p156 = pneg %p31
        $region26: #{seq2seq_forward.4} parent=23 // pred_check_branch
          %158 = sbr.rel (%p156) target = $region28
        $region27: #{seq2seq_forward.4} parent=23 // pred_region
          %s159 = sand.u32 %s21, 1
          %s160 = sand.u32 %s21, 1
          %s161 = smul.addr %s160, 4
          %s162 = scalar_lea.vmem [#allocation2], %s161
          %s163 = smul.addr %s11, 2
          %s164 = scalar_lea.vmem %s0, %s163
          // Predicated region
          $region29: #{seq2seq_forward.4} parent=27 // pred_check
            _
          $region30: #{seq2seq_forward.4} parent=27 // pred_check_branch
            %166 = sbr.rel (0) target = $region32
          $region31: #{seq2seq_forward.4} parent=27 // pred_region
            // Predicated region
            $region33: #{seq2seq_forward.4} parent=31 // pred_check
              _
            $region34: #{seq2seq_forward.4} parent=31 // pred_check_branch
              %168 = sbr.rel target = $region36
            $region35: #{seq2seq_forward.4} parent=31 // pred_region
              // Predicated region
              $region48: #{seq2seq_forward.4} parent=35 // pred_check
                _
              $region49: #{seq2seq_forward.4} parent=35 // pred_check_branch
                %185 = sbr.rel (0) target = $region51
              $region50: #{seq2seq_forward.4} parent=35 // pred_region
                loop: start=0, step=1, limit=1
                $region52: #{seq2seq_forward.4} parent=50 // loop_pre_header
                  _
                $region53: #{seq2seq_forward.4} parent=50 // loop_header
                  %s188 = sphi 0, %s192
                  %p189 = scmp.ge.s32.totalorder %s188, 1
                  %s193 = sphi %s164, %s164
                  %s194 = sphi %s162, %s162
                $region54: #{seq2seq_forward.4} parent=50 // loop_header_branch
                  %191 = sbr.rel (%p189) target = $region58
                $region55: #{seq2seq_forward.4} parent=50 // loop_body
                  %v195 = vld [vmem:[%s193] sm:$0x3]
                  %196 = vst [vmem:[%s194] sm:$0x3] %v195
                  %v197 = vld [vmem:[%s193 + $0x10] sm:$0x3]
                  %198 = vst [vmem:[%s194 + $0x2] sm:$0x3] %v197
                $region56: #{seq2seq_forward.4} parent=50 // loop_footer
                  %s192 = sadd.s32 1, %s188
                $region57: #{seq2seq_forward.4} parent=50 // loop_footer_branch
                  %187 = sbr.rel target = $region53
                $region58: #{seq2seq_forward.4} parent=50 // loop_exit
                  _
              $region51: #{seq2seq_forward.4} parent=35 // pred_fallthru
                _
            $region36: #{seq2seq_forward.4} parent=31 // pred_fallthru
              _
            // Predicated region
            $region37: #{seq2seq_forward.4} parent=31 // pred_check
              _
            $region38: #{seq2seq_forward.4} parent=31 // pred_check_branch
              %170 = sbr.rel (0) target = $region40
            $region39: #{seq2seq_forward.4} parent=31 // pred_region
              loop: start=0, step=1, limit=1
              $region41: #{seq2seq_forward.4} parent=39 // loop_pre_header
                _
              $region42: #{seq2seq_forward.4} parent=39 // loop_header
                %s173 = sphi 0, %s177
                %p174 = scmp.ge.s32.totalorder %s173, 1
                %s178 = sphi %s164, %s164
                %s179 = sphi %s162, %s162
              $region43: #{seq2seq_forward.4} parent=39 // loop_header_branch
                %176 = sbr.rel (%p174) target = $region47
              $region44: #{seq2seq_forward.4} parent=39 // loop_body
                %v180 = vld [vmem:[%s178] sm:$0x3]
                %181 = vst [vmem:[%s179] sm:$0x3] %v180
                %v182 = vld [vmem:[%s178 + $0x10] sm:$0x3]
                %183 = vst [vmem:[%s179 + $0x2] sm:$0x3] %v182
              $region45: #{seq2seq_forward.4} parent=39 // loop_footer
                %s177 = sadd.s32 1, %s173
              $region46: #{seq2seq_forward.4} parent=39 // loop_footer_branch
                %172 = sbr.rel target = $region42
              $region47: #{seq2seq_forward.4} parent=39 // loop_exit
                _
            $region40: #{seq2seq_forward.4} parent=31 // pred_fallthru
              _
          $region32: #{seq2seq_forward.4} parent=27 // pred_fallthru
            _
          %199 = vnop
        $region28: #{seq2seq_forward.4} parent=23 // pred_fallthru
          _
      $region24: #{seq2seq_forward.4} parent=5 // pred_fallthru
        _
      %p200 = scmp.le.s32.totalorder 1, %s11
      %p201 = scmp.lt.s32.totalorder %s11, 9
      %p202 = pnand %p200, %p201
      %p203 = pneg %p202
      // Predicated region
      $region59: #{seq2seq_forward.4} parent=5 // pred_check
        _
      $region60: #{seq2seq_forward.4} parent=5 // pred_check_branch
        %205 = sbr.rel (%p202) target = $region62
      $region61: #{seq2seq_forward.4} parent=5 // pred_region
        %s206 = ssub.s32 %s11, 1
        %s207 = sand.u32 %s24, 1
        %s208 = sand.u32 %s24, 1
        %s209 = smul.addr %s208, 4
        %s210 = scalar_lea.vmem [#allocation2], %s209
        // Predicated region
        $region63: #{seq2seq_forward.4} parent=61 // pred_check
          %p211 = pneg %p37
        $region64: #{seq2seq_forward.4} parent=61 // pred_check_branch
          %213 = sbr.rel (%p211) target = $region66
        $region65: #{seq2seq_forward.4} parent=61 // pred_region
          _
        $region66: #{seq2seq_forward.4} parent=61 // pred_fallthru
          _
        %s214 = sand.u32 %s24, 1
        %s215 = sand.u32 %s24, 1
        %s216 = smul.addr %s215, 4
        %s217 = scalar_lea.vmem [#allocation2], %s216
        %p218 = pneg %p37
        %p219 = pneg %p34
        %p220 = pneg %p58
        %p221 = pneg %p55
        %p222 = pneg %p79
        %p223 = pneg %p76
        %p224 = pneg %p105
        %p225 = pneg %p102
        %p226 = scmp.lt.s32.totalorder %s16, 7
        %s227 = scalar_select %p226, %s16, 7
        %s228 = smul.addr %s227, 2
        %s229 = scalar_lea.vmem %s3, %s228
        %p230 = pneg %p131
        %p231 = pneg %p128
        %p232 = scmp.lt.s32.totalorder %s16, 7
        %s233 = scalar_select %p232, %s16, 7
        %s234 = smul.addr %s233, 2
        %s235 = scalar_lea.vmem %s4, %s234
        %p236 = scmp.lt.s32.totalorder %s16, 7
        %s237 = scalar_select %p236, %s16, 7
        %s238 = smul.addr %s237, 2
        %s239 = scalar_lea.vmem %s3, %s238
        %p240 = scmp.lt.s32.totalorder %s16, 7
        %s241 = scalar_select %p240, %s16, 7
        %s242 = smul.addr %s241, 2
        %s243 = scalar_lea.vmem %s4, %s242
        %v245 = vld [vmem:[%s210] sm:$0x3]
        %s246 = scalar_lea.vmem %s210, 2 [#allocation2]
        %v247 = vld [vmem:[%s246] sm:$0x3]
        %v248 = vadd.f32 %v245, %v247
        %vm249 = vcmask 254976
        %250 = vst.msk [vmem:[%s239] sm:$0x3] %vm249, %v248
        %v251 = vpack.c.bf16 %v248, %v248
        %v252 = vld [vmem:[%s1] sm:$0xf]
        %v253 = vld [vmem:[%s1 + $0x4] sm:$0xf]
        %v254 = vld [vmem:[%s1 + $0x8] sm:$0xf]
        %v255 = vld [vmem:[%s1 + $0xc] sm:$0xf]
        %v256 = vld [vmem:[%s2] sm:$0x1]
        %v258 = vlaneseq
        %v259 = vshrl.u32 %v258, 7
        %v260 = vsub.s32 0, %v259
        %v261 = vrot.slane %v256, %v260
        %v267 = vunpack.c.l.b16 %v252
        %v268 = vunpack.c.l.b16 %v253
        %v269 = vunpack.c.l.b16 %v254
        %v270 = vunpack.c.l.b16 %v255
        %v271 = vpack.c.b16 %v268, %v267
        %v272 = vpack.c.b16 %v270, %v269
        %vm275 = vcmask 261120
        %v277 = vsel %vm275, %v251, 0
        %279 = vmatprep.subr.bf16.mxu0 0
        %280 = vmatpush1.bf16.msra.mxu0 %v271
        %281 = vmatprep.subr.bf16.mxu0 0
        %282 = vmatpush1.bf16.msra.mxu0 %v272
        %283 = vmatprep.subr.bf16.mxu0 0
        %284 = vmatpush1.bf16.msra.mxu0 0
        %285 = vmatprep.subr.bf16.mxu0 0
        %286 = vmatpush1.bf16.msra.mxu0 0
        %287 = vmatprep.subr.bf16.mxu0 0
        %288 = vmatpush1.bf16.msra.mxu0 0
        %289 = vmatprep.subr.bf16.mxu0 0
        %290 = vmatpush1.bf16.msra.mxu0 0
        %291 = vmatprep.subr.bf16.mxu0 0
        %292 = vmatpush1.bf16.msra.mxu0 0
        %293 = vmatprep.subr.bf16.mxu0 0
        %294 = vmatpush1.bf16.msra.mxu0 0
        %295 = vmatprep.subr.bf16.mxu0 0
        %296 = vmatpush1.bf16.msra.mxu0 0
        %297 = vmatprep.subr.bf16.mxu0 0
        %298 = vmatpush1.bf16.msra.mxu0 0
        %299 = vmatprep.subr.bf16.mxu0 0
        %300 = vmatpush1.bf16.msra.mxu0 0
        %301 = vmatprep.subr.bf16.mxu0 0
        %302 = vmatpush1.bf16.msra.mxu0 0
        %303 = vmatprep.subr.bf16.mxu0 0
        %304 = vmatpush1.bf16.msra.mxu0 0
        %305 = vmatprep.subr.bf16.mxu0 0
        %306 = vmatpush1.bf16.msra.mxu0 0
        %307 = vmatprep.subr.bf16.mxu0 0
        %308 = vmatpush1.bf16.msra.mxu0 0
        %309 = vmatprep.subr.bf16.mxu0 0
        %310 = vmatpush1.bf16.msra.mxu0 0
        %311 = vmatprep.mubr.bf16.mxu0 0
        %312 = vmatmul.mubr.bf16.gmra.mrb[0].mxu0 %v277
        %v313 = vpop.f32.mrb[0].mxu0
        %v314 = vadd.f32 %v261, %v313
        %v315 = vpop.f32.mrb[0].mxu0
        %v316 = vpop.f32.mrb[0].mxu0
        %v317 = vpop.f32.mrb[0].mxu0
        %318 = vdwg.mxu0
        %319 = vst.msk [vmem:[%s243] sm:$0x3] %vm249, %v314
        %p320 = scmp.lt.s32.totalorder %s16, 7
        %s321 = scalar_select %p320, %s16, 7
        %s322 = smul.addr %s321, 2
        %s323 = scalar_lea.vmem %s3, %s322
        %p324 = scmp.lt.s32.totalorder %s16, 7
        %s325 = scalar_select %p324, %s16, 7
        %s326 = smul.addr %s325, 2
        %s327 = scalar_lea.vmem %s4, %s326
        // Predicated region
        $region67: #{seq2seq_forward.4} parent=61 // pred_check
          %p328 = pneg %p102
        $region68: #{seq2seq_forward.4} parent=61 // pred_check_branch
          %330 = sbr.rel (%p328) target = $region70
        $region69: #{seq2seq_forward.4} parent=61 // pred_region
          _
        $region70: #{seq2seq_forward.4} parent=61 // pred_fallthru
          _
        // Predicated region
        $region71: #{seq2seq_forward.4} parent=61 // pred_check
          %p331 = pneg %p128
        $region72: #{seq2seq_forward.4} parent=61 // pred_check_branch
          %333 = sbr.rel (%p331) target = $region74
        $region73: #{seq2seq_forward.4} parent=61 // pred_region
          _
        $region74: #{seq2seq_forward.4} parent=61 // pred_fallthru
          _
      $region62: #{seq2seq_forward.4} parent=5 // pred_fallthru
        _
      %p334 = scmp.le.s32.totalorder 2, %s11
      // Predicated region
      $region75: #{seq2seq_forward.4} parent=5 // pred_check
        %p335 = pneg %p334
      $region76: #{seq2seq_forward.4} parent=5 // pred_check_branch
        %337 = sbr.rel (%p335) target = $region78
      $region77: #{seq2seq_forward.4} parent=5 // pred_region
        %s338 = ssub.s32 %s11, 2
        // Predicated region
        $region79: #{seq2seq_forward.4} parent=77 // pred_check
          %p339 = pneg %p108
        $region80: #{seq2seq_forward.4} parent=77 // pred_check_branch
          %341 = sbr.rel (%p339) target = $region82
        $region81: #{seq2seq_forward.4} parent=77 // pred_region
          %p342 = scmp.lt.s32.totalorder %s17, 7
          %s343 = scalar_select %p342, %s17, 7
          %s344 = smul.addr %s343, 2
          %s345 = scalar_lea.vmem %s3, %s344
        $region82: #{seq2seq_forward.4} parent=77 // pred_fallthru
          _
        // Predicated region
        $region83: #{seq2seq_forward.4} parent=77 // pred_check
          %p346 = pneg %p134
        $region84: #{seq2seq_forward.4} parent=77 // pred_check_branch
          %348 = sbr.rel (%p346) target = $region86
        $region85: #{seq2seq_forward.4} parent=77 // pred_region
          %p349 = scmp.lt.s32.totalorder %s17, 7
          %s350 = scalar_select %p349, %s17, 7
          %s351 = smul.addr %s350, 2
          %s352 = scalar_lea.vmem %s4, %s351
        $region86: #{seq2seq_forward.4} parent=77 // pred_fallthru
          _
      $region78: #{seq2seq_forward.4} parent=5 // pred_fallthru
        _
    $region6: #{seq2seq_forward.4} parent=1 // loop_footer
      %s15 = sadd.s32 1, %s11
    $region7: #{seq2seq_forward.4} parent=1 // loop_footer_branch
      %10 = sbr.rel target = $region3
    $region8: #{seq2seq_forward.4} parent=1 // loop_exit
      _

// kernel: seq2seq_forward.3
$region0: #{seq2seq_forward.3}
  #allocation0 [shape = 'u32[]', space=smem, size = 0x4, offset = 0x4, fixed_abs, tag = 'smem constant byte address 0x4 - core index']
  #allocation1 [shape = 'u32[144,128]{1,0:T(1,128)}', space=vmem, size = 0x12000, scoped, tag = 'internal scratch']
  #allocation2 [shape = 'f32[2,32]{1,0:T(2,128)}', space=vmem, size = 0x400, scoped, tag = 'scratch operand']
  %s0 = inlined_call_operand.vmem [shape: bf16[8,2,16], index: 0, kind: input, shape index: {}]
  %s1 = inlined_call_operand.vmem [shape: bf16[2,16,96], index: 1, kind: input, shape index: {}]
  %s2 = inlined_call_operand.vmem [shape: bf16[2,32,96], index: 2, kind: input, shape index: {}]
  %s3 = inlined_call_operand.vmem [shape: f32[2,1,96], index: 3, kind: input, shape index: {}]
  %s4 = inlined_call_operand.vmem [shape: f32[2,1,96], index: 4, kind: input, shape index: {}]
  %s5 = inlined_call_operand.vmem [shape: f32[2,8,2,32], index: 5, kind: output, shape index: {}]
  %s6 = sld [smem:[#allocation0]]
  $region57: #{seq2seq_forward.3} parent=0
    _
  %s8 = ssub.s32 1, %s6
  %s9 = scalar_select 0, %s8, %s6
  loop: start=0, step=1, limit=18
  $region2: #{seq2seq_forward.3} parent=0 // loop_pre_header
    _
  $region3: #{seq2seq_forward.3} parent=0 // loop_header
    %s11 = sphi 0, %s15
    %p12 = scmp.ge.s32.totalorder %s11, 18
    %s18 = sphi 0, %s30
    %s19 = sphi 0, %s26
    %s20 = sphi 0, %s18
    %s21 = sphi 0, %s19
    %s22 = sphi 0, %s20
    %s23 = sphi 0, %s21
    %s43 = sphi 0, %s45
    %s46 = sphi 0, %s43
    %s47 = sphi 0, %s46
    %s63 = sphi 0, %s47
    %s69 = sphi 0, %s71
    %s72 = sphi 0, %s69
    %s73 = sphi 0, %s72
    %s89 = sphi 0, %s73
    %s95 = sphi 0, %s97
    %s98 = sphi 0, %s95
    %s99 = sphi 0, %s98
    %s115 = sphi 0, %s99
    %s121 = sphi 0, %s123
    %s124 = sphi 0, %s121
    %s125 = sphi 0, %s124
    %s141 = sphi 0, %s125
    %s147 = sphi 0, %s149
    %s150 = sphi 0, %s147
    %s151 = sphi 0, %s150
    %s167 = sphi 0, %s151
    %s185 = sphi 0, %s187
    %s188 = sphi 0, %s185
    %s189 = sphi 0, %s188
    %s205 = sphi 0, %s189
  $region4: #{seq2seq_forward.3} parent=0 // loop_header_branch
    %14 = sbr.rel (%p12) target = $region8
  $region5: #{seq2seq_forward.3} parent=0 // loop_body
    %s16 = ssub.s32 %s11, 1
    %s17 = ssub.s32 %s11, 2
    %s24 = sadd.s32 1, %s19
    %p25 = scmp.ge.s32.totalorder %s24, 8
    %s26 = scalar_select %p25, 0, %s24
    %s27 = sadd.s32 1, %s18
    %s28 = scalar_select %p25, %s27, %s18
    %p29 = scmp.ge.s32.totalorder %s28, 2
    %s30 = scalar_select %p29, 0, %s28
    %s31 = ssub.s32 1, %s18
    %s32 = smul.u32 %s31, %s19
    %s33 = ssub.s32 7, %s19
    %s34 = smul.u32 %s18, %s33
    %s35 = sadd.s32 %s32, %s34
    %s36 = ssub.s32 1, %s30
    %s37 = smul.u32 %s36, %s26
    %s38 = ssub.s32 7, %s26
    %s39 = smul.u32 %s30, %s38
    %s40 = sadd.s32 %s37, %s39
    %s41 = ssub.s32 %s35, %s40
    %p42 = scmp.eq.s32.totalorder %s41, 0
    %s44 = sadd.s32 %s43, 1
    %s45 = scalar_select %p42, %s43, %s44
    %p48 = pneg %p42
    %p49 = scmp.eq.s32.totalorder %s11, 15
    %p50 = por %p48, %p49
    %p51 = scmp.ne.s32.totalorder %s43, %s46
    %p52 = scmp.eq.s32.totalorder %s11, 0
    %p53 = por %p51, %p52
    %p54 = scmp.ne.s32.totalorder %s43, %s46
    %p55 = scmp.eq.s32.totalorder %s16, 15
    %p56 = por %p54, %p55
    %p57 = scmp.ne.s32.totalorder %s46, %s47
    %p58 = scmp.eq.s32.totalorder %s16, 0
    %p59 = por %p57, %p58
    %p60 = scmp.ne.s32.totalorder %s46, %s47
    %p61 = scmp.eq.s32.totalorder %s17, 15
    %p62 = por %p60, %p61
    %p64 = scmp.ne.s32.totalorder %s47, %s63
    %p65 = scmp.eq.s32.totalorder %s17, 0
    %p66 = por %p64, %p65
    %s67 = ssub.s32 %s18, %s30
    %p68 = scmp.eq.s32.totalorder %s67, 0
    %s70 = sadd.s32 %s69, 1
    %s71 = scalar_select %p68, %s69, %s70
    %p74 = pneg %p68
    %p75 = scmp.eq.s32.totalorder %s11, 15
    %p76 = por %p74, %p75
    %p77 = scmp.ne.s32.totalorder %s69, %s72
    %p78 = scmp.eq.s32.totalorder %s11, 0
    %p79 = por %p77, %p78
    %p80 = scmp.ne.s32.totalorder %s69, %s72
    %p81 = scmp.eq.s32.totalorder %s16, 15
    %p82 = por %p80, %p81
    %p83 = scmp.ne.s32.totalorder %s72, %s73
    %p84 = scmp.eq.s32.totalorder %s16, 0
    %p85 = por %p83, %p84
    %p86 = scmp.ne.s32.totalorder %s72, %s73
    %p87 = scmp.eq.s32.totalorder %s17, 15
    %p88 = por %p86, %p87
    %p90 = scmp.ne.s32.totalorder %s73, %s89
    %p91 = scmp.eq.s32.totalorder %s17, 0
    %p92 = por %p90, %p91
    %s93 = ssub.s32 %s18, %s30
    %p94 = scmp.eq.s32.totalorder %s93, 0
    %s96 = sadd.s32 %s95, 1
    %s97 = scalar_select %p94, %s95, %s96
    %p100 = pneg %p94
    %p101 = scmp.eq.s32.totalorder %s11, 15
    %p102 = por %p100, %p101
    %p103 = scmp.ne.s32.totalorder %s95, %s98
    %p104 = scmp.eq.s32.totalorder %s11, 0
    %p105 = por %p103, %p104
    %p106 = scmp.ne.s32.totalorder %s95, %s98
    %p107 = scmp.eq.s32.totalorder %s16, 15
    %p108 = por %p106, %p107
    %p109 = scmp.ne.s32.totalorder %s98, %s99
    %p110 = scmp.eq.s32.totalorder %s16, 0
    %p111 = por %p109, %p110
    %p112 = scmp.ne.s32.totalorder %s98, %s99
    %p113 = scmp.eq.s32.totalorder %s17, 15
    %p114 = por %p112, %p113
    %p116 = scmp.ne.s32.totalorder %s99, %s115
    %p117 = scmp.eq.s32.totalorder %s17, 0
    %p118 = por %p116, %p117
    %s119 = ssub.s32 %s18, %s30
    %p120 = scmp.eq.s32.totalorder %s119, 0
    %s122 = sadd.s32 %s121, 1
    %s123 = scalar_select %p120, %s121, %s122
    %p126 = pneg %p120
    %p127 = scmp.eq.s32.totalorder %s11, 15
    %p128 = por %p126, %p127
    %p129 = scmp.ne.s32.totalorder %s121, %s124
    %p130 = scmp.eq.s32.totalorder %s11, 0
    %p131 = por %p129, %p130
    %p132 = scmp.ne.s32.totalorder %s121, %s124
    %p133 = scmp.eq.s32.totalorder %s16, 15
    %p134 = por %p132, %p133
    %p135 = scmp.ne.s32.totalorder %s124, %s125
    %p136 = scmp.eq.s32.totalorder %s16, 0
    %p137 = por %p135, %p136
    %p138 = scmp.ne.s32.totalorder %s124, %s125
    %p139 = scmp.eq.s32.totalorder %s17, 15
    %p140 = por %p138, %p139
    %p142 = scmp.ne.s32.totalorder %s125, %s141
    %p143 = scmp.eq.s32.totalorder %s17, 0
    %p144 = por %p142, %p143
    %s145 = ssub.s32 %s18, %s30
    %p146 = scmp.eq.s32.totalorder %s145, 0
    %s148 = sadd.s32 %s147, 1
    %s149 = scalar_select %p146, %s147, %s148
    %p152 = pneg %p146
    %p153 = scmp.eq.s32.totalorder %s11, 15
    %p154 = por %p152, %p153
    %p155 = scmp.ne.s32.totalorder %s147, %s150
    %p156 = scmp.eq.s32.totalorder %s11, 0
    %p157 = por %p155, %p156
    %p158 = scmp.ne.s32.totalorder %s147, %s150
    %p159 = scmp.eq.s32.totalorder %s16, 15
    %p160 = por %p158, %p159
    %p161 = scmp.ne.s32.totalorder %s150, %s151
    %p162 = scmp.eq.s32.totalorder %s16, 0
    %p163 = por %p161, %p162
    %p164 = scmp.ne.s32.totalorder %s150, %s151
    %p165 = scmp.eq.s32.totalorder %s17, 15
    %p166 = por %p164, %p165
    %p168 = scmp.ne.s32.totalorder %s151, %s167
    %p169 = scmp.eq.s32.totalorder %s17, 0
    %p170 = por %p168, %p169
    %s171 = ssub.s32 1, %s18
    %s172 = smul.u32 %s171, %s19
    %s173 = ssub.s32 7, %s19
    %s174 = smul.u32 %s18, %s173
    %s175 = sadd.s32 %s172, %s174
    %s176 = ssub.s32 1, %s30
    %s177 = smul.u32 %s176, %s26
    %s178 = ssub.s32 7, %s26
    %s179 = smul.u32 %s30, %s178
    %s180 = sadd.s32 %s177, %s179
    %s181 = ssub.s32 %s18, %s30
    %s182 = ssub.s32 %s175, %s180
    %s183 = sor.u32 %s181, %s182
    %p184 = scmp.eq.s32.totalorder %s183, 0
    %s186 = sadd.s32 %s185, 1
    %s187 = scalar_select %p184, %s185, %s186
    %p190 = pneg %p184
    %p191 = scmp.eq.s32.totalorder %s11, 15
    %p192 = por %p190, %p191
    %p193 = scmp.ne.s32.totalorder %s185, %s188
    %p194 = scmp.eq.s32.totalorder %s11, 0
    %p195 = por %p193, %p194
    %p196 = scmp.ne.s32.totalorder %s185, %s188
    %p197 = scmp.eq.s32.totalorder %s16, 15
    %p198 = por %p196, %p197
    %p199 = scmp.ne.s32.totalorder %s188, %s189
    %p200 = scmp.eq.s32.totalorder %s16, 0
    %p201 = por %p199, %p200
    %p202 = scmp.ne.s32.totalorder %s188, %s189
    %p203 = scmp.eq.s32.totalorder %s17, 15
    %p204 = por %p202, %p203
    %p206 = scmp.ne.s32.totalorder %s189, %s205
    %p207 = scmp.eq.s32.totalorder %s17, 0
    %p208 = por %p206, %p207
    %p209 = scmp.le.s32.totalorder 1, %s11
    %p210 = scmp.lt.s32.totalorder %s11, 17
    %p211 = pnand %p209, %p210
    %p212 = pneg %p211
    // Predicated region
    $region9: #{seq2seq_forward.3} parent=5 // pred_check
      _
    $region10: #{seq2seq_forward.3} parent=5 // pred_check_branch
      %214 = sbr.rel (%p211) target = $region12
    $region11: #{seq2seq_forward.3} parent=5 // pred_region
      %s215 = ssub.s32 %s11, 1
    $region12: #{seq2seq_forward.3} parent=5 // pred_fallthru
      _
    %p216 = scmp.lt.s32.totalorder %s11, 16
    // Predicated region
    $region13: #{seq2seq_forward.3} parent=5 // pred_check
      %p217 = pneg %p216
    $region14: #{seq2seq_forward.3} parent=5 // pred_check_branch
      %219 = sbr.rel (%p217) target = $region16
    $region15: #{seq2seq_forward.3} parent=5 // pred_region
      // Predicated region
      $region17: #{seq2seq_forward.3} parent=15 // pred_check
        %p220 = pneg %p53
      $region18: #{seq2seq_forward.3} parent=15 // pred_check_branch
        %222 = sbr.rel (%p220) target = $region20
      $region19: #{seq2seq_forward.3} parent=15 // pred_region
        %s223 = ssub.s32 1, %s18
        %s224 = smul.u32 %s223, %s19
        %s225 = ssub.s32 7, %s19
        %s226 = smul.u32 %s18, %s225
        %s227 = sadd.s32 %s224, %s226
        %p228 = scmp.lt.s32.totalorder %s227, 7
        %s229 = scalar_select %p228, %s227, 7
        %s230 = scalar_lea.vmem %s0, %s229
        %s231 = ssub.s32 1, %s18
        %s232 = smul.u32 %s231, %s19
        %s233 = ssub.s32 7, %s19
        %s234 = smul.u32 %s18, %s233
        %s235 = sadd.s32 %s232, %s234
      $region20: #{seq2seq_forward.3} parent=15 // pred_fallthru
        _
      // Predicated region
      $region21: #{seq2seq_forward.3} parent=15 // pred_check
        %p236 = pneg %p79
      $region22: #{seq2seq_forward.3} parent=15 // pred_check_branch
        %238 = sbr.rel (%p236) target = $region24
      $region23: #{seq2seq_forward.3} parent=15 // pred_region
        %p239 = scmp.lt.s32.totalorder %s18, 1
        %s240 = scalar_select %p239, %s18, 1
        %s241 = smul.addr %s240, 2
        %s242 = smul.addr %s241, 4
        %s243 = scalar_lea.vmem %s1, %s242
      $region24: #{seq2seq_forward.3} parent=15 // pred_fallthru
        _
      // Predicated region
      $region25: #{seq2seq_forward.3} parent=15 // pred_check
        %p244 = pneg %p105
      $region26: #{seq2seq_forward.3} parent=15 // pred_check_branch
        %246 = sbr.rel (%p244) target = $region28
      $region27: #{seq2seq_forward.3} parent=15 // pred_region
        %p247 = scmp.lt.s32.totalorder %s18, 1
        %s248 = scalar_select %p247, %s18, 1
        %s249 = smul.addr %s248, 4
        %s250 = smul.addr %s249, 4
        %s251 = scalar_lea.vmem %s2, %s250
      $region28: #{seq2seq_forward.3} parent=15 // pred_fallthru
        _
      // Predicated region
      $region29: #{seq2seq_forward.3} parent=15 // pred_check
        %p252 = pneg %p131
      $region30: #{seq2seq_forward.3} parent=15 // pred_check_branch
        %254 = sbr.rel (%p252) target = $region32
      $region31: #{seq2seq_forward.3} parent=15 // pred_region
        %p255 = scmp.lt.s32.totalorder %s18, 1
        %s256 = scalar_select %p255, %s18, 1
        %s257 = scalar_lea.vmem %s3, %s256
      $region32: #{seq2seq_forward.3} parent=15 // pred_fallthru
        _
      // Predicated region
      $region33: #{seq2seq_forward.3} parent=15 // pred_check
        %p258 = pneg %p157
      $region34: #{seq2seq_forward.3} parent=15 // pred_check_branch
        %260 = sbr.rel (%p258) target = $region36
      $region35: #{seq2seq_forward.3} parent=15 // pred_region
        %p261 = scmp.lt.s32.totalorder %s18, 1
        %s262 = scalar_select %p261, %s18, 1
        %s263 = scalar_lea.vmem %s4, %s262
      $region36: #{seq2seq_forward.3} parent=15 // pred_fallthru
        _
    $region16: #{seq2seq_forward.3} parent=5 // pred_fallthru
      _
    %p264 = scmp.le.s32.totalorder 1, %s11
    %p265 = scmp.lt.s32.totalorder %s11, 17
    %p266 = pnand %p264, %p265
    %p267 = pneg %p266
    // Predicated region
    $region37: #{seq2seq_forward.3} parent=5 // pred_check
      _
    $region38: #{seq2seq_forward.3} parent=5 // pred_check_branch
      %269 = sbr.rel (%p266) target = $region40
    $region39: #{seq2seq_forward.3} parent=5 // pred_region
      %s270 = ssub.s32 %s11, 1
      %s271 = ssub.s32 1, %s20
      %s272 = smul.u32 %s271, %s21
      %s273 = ssub.s32 7, %s21
      %s274 = smul.u32 %s20, %s273
      %s275 = sadd.s32 %s272, %s274
      %p276 = scmp.lt.s32.totalorder %s275, 7
      %s277 = scalar_select %p276, %s275, 7
      %s278 = scalar_lea.vmem %s0, %s277
      %p279 = pneg %p59
      %p280 = pneg %p56
      %p281 = scmp.lt.s32.totalorder %s20, 1
      %s282 = scalar_select %p281, %s20, 1
      %s283 = smul.addr %s282, 2
      %s284 = smul.addr %s283, 4
      %s285 = scalar_lea.vmem %s1, %s284
      %p286 = pneg %p85
      %p287 = pneg %p82
      %p288 = scmp.lt.s32.totalorder %s20, 1
      %s289 = scalar_select %p288, %s20, 1
      %s290 = smul.addr %s289, 4
      %s291 = smul.addr %s290, 4
      %s292 = scalar_lea.vmem %s2, %s291
      %p293 = pneg %p111
      %p294 = pneg %p108
      %p295 = scmp.lt.s32.totalorder %s20, 1
      %s296 = scalar_select %p295, %s20, 1
      %s297 = scalar_lea.vmem %s3, %s296
      %p298 = pneg %p137
      %p299 = pneg %p134
      %p300 = scmp.lt.s32.totalorder %s20, 1
      %s301 = scalar_select %p300, %s20, 1
      %s302 = scalar_lea.vmem %s4, %s301
      %p303 = pneg %p163
      %p304 = pneg %p160
      %p305 = pneg %p201
      %p306 = pneg %p198
      %s307 = ssub.s32 1, %s20
      %s308 = smul.u32 %s307, %s21
      %s309 = ssub.s32 7, %s21
      %s310 = smul.u32 %s20, %s309
      %s311 = sadd.s32 %s308, %s310
      %p312 = scmp.lt.s32.totalorder %s20, 1
      %s313 = scalar_select %p312, %s20, 1
      %p314 = scmp.lt.s32.totalorder %s311, 7
      %s315 = scalar_select %p314, %s311, 7
      %s316 = smul.addr %s313, 8
      %s317 = sadd.s32 %s315, %s316
      %s318 = smul.addr %s317, 2
      %s319 = scalar_lea.vmem %s5, %s318
      %s320 = ssub.s32 1, %s20
      %s321 = smul.u32 %s320, %s21
      %s322 = ssub.s32 7, %s21
      %s323 = smul.u32 %s20, %s322
      %s324 = sadd.s32 %s321, %s323
      %p325 = scmp.lt.s32.totalorder %s324, 7
      %s326 = scalar_select %p325, %s324, 7
      %s327 = scalar_lea.vmem %s0, %s326
      %s328 = ssub.s32 1, %s20
      %s329 = smul.u32 %s328, %s21
      %s330 = ssub.s32 7, %s21
      %s331 = smul.u32 %s20, %s330
      %s332 = sadd.s32 %s329, %s331
      %p333 = scmp.lt.s32.totalorder %s20, 1
      %s334 = scalar_select %p333, %s20, 1
      %s335 = smul.addr %s334, 2
      %s336 = smul.addr %s335, 4
      %s337 = scalar_lea.vmem %s1, %s336
      %p338 = scmp.lt.s32.totalorder %s20, 1
      %s339 = scalar_select %p338, %s20, 1
      %s340 = smul.addr %s339, 4
      %s341 = smul.addr %s340, 4
      %s342 = scalar_lea.vmem %s2, %s341
      %p343 = scmp.lt.s32.totalorder %s20, 1
      %s344 = scalar_select %p343, %s20, 1
      %s345 = scalar_lea.vmem %s3, %s344
      %p346 = scmp.lt.s32.totalorder %s20, 1
      %s347 = scalar_select %p346, %s20, 1
      %s348 = scalar_lea.vmem %s4, %s347
      %s349 = ssub.s32 1, %s20
      %s350 = smul.u32 %s349, %s21
      %s351 = ssub.s32 7, %s21
      %s352 = smul.u32 %s20, %s351
      %s353 = sadd.s32 %s350, %s352
      %p354 = scmp.lt.s32.totalorder %s20, 1
      %s355 = scalar_select %p354, %s20, 1
      %p356 = scmp.lt.s32.totalorder %s353, 7
      %s357 = scalar_select %p356, %s353, 7
      %s358 = smul.addr %s355, 8
      %s359 = sadd.s32 %s357, %s358
      %s360 = smul.addr %s359, 2
      %s361 = scalar_lea.vmem %s5, %s360
      %s362 = ssub.s32 1, %s20
      %s363 = smul.u32 %s362, %s21
      %s364 = ssub.s32 7, %s21
      %s365 = smul.u32 %s20, %s364
      %s366 = sadd.s32 %s363, %s365
      %p368 = scmp.eq.s32.totalorder %s21, 0
      // Predicated region
      $region41: #{seq2seq_forward.3} parent=39 // pred_check
        %p369 = pneg %p368
      $region42: #{seq2seq_forward.3} parent=39 // pred_check_branch
        %371 = sbr.rel (%p369) target = $region44
      $region43: #{seq2seq_forward.3} parent=39 // pred_region
        %vm372 = vcmask 254976
        %373 = vst.msk [vmem:[#allocation2] sm:$0x3] %vm372, 0.0
      $region44: #{seq2seq_forward.3} parent=39 // pred_fallthru
        _
      %v374 = vld [vmem:[%s327] sm:$0x1]
      %v375 = vld [vmem:[#allocation2] sm:$0x3]
      %v376 = vld [vmem:[%s337] sm:$0xf]
      %v377 = vld [vmem:[%s337 + $0x4] sm:$0xf]
      %v378 = vld [vmem:[%s345] sm:$0x1]
      %v380 = vlaneseq
      %v381 = vshrl.u32 %v380, 7
      %v382 = vsub.s32 0, %v381
      %v383 = vrot.slane %v378, %v382
      %v387 = vunpack.c.l.b16 %v376
      %v388 = vunpack.c.l.b16 %v377
      %v389 = vpack.c.b16 %v388, %v387
      %vm391 = vcmask 130048
      %v393 = vsel %vm391, %v374, 0
      %395 = vmatprep.subr.bf16.mxu0 0
      %396 = vmatpush1.bf16.msra.mxu0 %v389
      %397 = vmatprep.subr.bf16.mxu0 0
      %398 = vmatpush1.bf16.msra.mxu0 0
      %399 = vmatprep.subr.bf16.mxu0 0
      %400 = vmatpush1.bf16.msra.mxu0 0
      %401 = vmatprep.subr.bf16.mxu0 0
      %402 = vmatpush1.bf16.msra.mxu0 0
      %403 = vmatprep.subr.bf16.mxu0 0
      %404 = vmatpush1.bf16.msra.mxu0 0
      %405 = vmatprep.subr.bf16.mxu0 0
      %406 = vmatpush1.bf16.msra.mxu0 0
      %407 = vmatprep.subr.bf16.mxu0 0
      %408 = vmatpush1.bf16.msra.mxu0 0
      %409 = vmatprep.subr.bf16.mxu0 0
      %410 = vmatpush1.bf16.msra.mxu0 0
      %411 = vmatprep.subr.bf16.mxu0 0
      %412 = vmatpush1.bf16.msra.mxu0 0
      %413 = vmatprep.subr.bf16.mxu0 0
      %414 = vmatpush1.bf16.msra.mxu0 0
      %415 = vmatprep.subr.bf16.mxu0 0
      %416 = vmatpush1.bf16.msra.mxu0 0
      %417 = vmatprep.subr.bf16.mxu0 0
      %418 = vmatpush1.bf16.msra.mxu0 0
      %419 = vmatprep.subr.bf16.mxu0 0
      %420 = vmatpush1.bf16.msra.mxu0 0
      %421 = vmatprep.subr.bf16.mxu0 0
      %422 = vmatpush1.bf16.msra.mxu0 0
      %423 = vmatprep.subr.bf16.mxu0 0
      %424 = vmatpush1.bf16.msra.mxu0 0
      %425 = vmatprep.subr.bf16.mxu0 0
      %426 = vmatpush1.bf16.msra.mxu0 0
      %427 = vmatprep.mubr.bf16.mxu0 0
      %428 = vmatmul.mubr.bf16.gmra.mrb[0].mxu0 %v393
      %v429 = vpop.f32.mrb[0].mxu0
      %v430 = vadd.f32 %v383, %v429
      %v431 = vpop.f32.mrb[0].mxu0
      %v432 = vpop.f32.mrb[0].mxu0
      %v433 = vpop.f32.mrb[0].mxu0
      %434 = vdwg.mxu0
      %v435 = vpack.c.bf16 %v375, %v375
      %v436 = vld [vmem:[%s342] sm:$0xf]
      %v437 = vld [vmem:[%s342 + $0x4] sm:$0xf]
      %v438 = vld [vmem:[%s342 + $0x8] sm:$0xf]
      %v439 = vld [vmem:[%s342 + $0xc] sm:$0xf]
      %v440 = vld [vmem:[%s348] sm:$0x1]
      %v442 = vlaneseq
      %v443 = vshrl.u32 %v442, 7
      %v444 = vsub.s32 0, %v443
      %v445 = vrot.slane %v440, %v444
      %v451 = vunpack.c.l.b16 %v436
      %v452 = vunpack.c.l.b16 %v437
      %v453 = vunpack.c.l.b16 %v438
      %v454 = vunpack.c.l.b16 %v439
      %v455 = vpack.c.b16 %v452, %v451
      %v456 = vpack.c.b16 %v454, %v453
      %vm459 = vcmask 261120
      %v461 = vsel %vm459, %v435, 0
      %463 = vmatprep.subr.bf16.mxu0 0
      %464 = vmatpush1.bf16.msra.mxu0 %v455
      %465 = vmatprep.subr.bf16.mxu0 0
      %466 = vmatpush1.bf16.msra.mxu0 %v456
      %467 = vmatprep.subr.bf16.mxu0 0
      %468 = vmatpush1.bf16.msra.mxu0 0
      %469 = vmatprep.subr.bf16.mxu0 0
      %470 = vmatpush1.bf16.msra.mxu0 0
      %471 = vmatprep.subr.bf16.mxu0 0
      %472 = vmatpush1.bf16.msra.mxu0 0
      %473 = vmatprep.subr.bf16.mxu0 0
      %474 = vmatpush1.bf16.msra.mxu0 0
      %475 = vmatprep.subr.bf16.mxu0 0
      %476 = vmatpush1.bf16.msra.mxu0 0
      %477 = vmatprep.subr.bf16.mxu0 0
      %478 = vmatpush1.bf16.msra.mxu0 0
      %479 = vmatprep.subr.bf16.mxu0 0
      %480 = vmatpush1.bf16.msra.mxu0 0
      %481 = vmatprep.subr.bf16.mxu0 0
      %482 = vmatpush1.bf16.msra.mxu0 0
      %483 = vmatprep.subr.bf16.mxu0 0
      %484 = vmatpush1.bf16.msra.mxu0 0
      %485 = vmatprep.subr.bf16.mxu0 0
      %486 = vmatpush1.bf16.msra.mxu0 0
      %487 = vmatprep.subr.bf16.mxu0 0
      %488 = vmatpush1.bf16.msra.mxu0 0
      %489 = vmatprep.subr.bf16.mxu0 0
      %490 = vmatpush1.bf16.msra.mxu0 0
      %491 = vmatprep.subr.bf16.mxu0 0
      %492 = vmatpush1.bf16.msra.mxu0 0
      %493 = vmatprep.subr.bf16.mxu0 0
      %494 = vmatpush1.bf16.msra.mxu0 0
      %495 = vmatprep.mubr.bf16.mxu0 0
      %496 = vmatmul.mubr.bf16.gmra.mrb[0].mxu0 %v461
      %v497 = vpop.f32.mrb[0].mxu0
      %v498 = vadd.f32 %v445, %v497
      %v499 = vpop.f32.mrb[0].mxu0
      %v500 = vpop.f32.mrb[0].mxu0
      %v501 = vpop.f32.mrb[0].mxu0
      %502 = vdwg.mxu0
      %v503 = vadd.f32 %v430, %v498
      %v504 = vxor.u32 %v503, 2147483648
      %v505 = vmul.f32 %v504, 1.442695
      %v506 = vpow.pop %v505
      %v507 = vadd.f32 %v506, 1.0
      %v508 = vrcp.pop %v507
      %v509 = vmul.f32 1.0, %v508
      %511 = vrot.lane.b32.xlu0 %v498, 64
      %v512 = vpop.permute.xlu0 %511
      %v514 = vmul.f32 %v509, %v512
      %516 = vrot.lane.b32.xlu0 %v514, 64
      %v517 = vpop.permute.xlu0 %516
      %v519 = vadd.f32 %v430, %v517
      %v520 = vtanh.pop %v519
      %v521 = vsub.f32 1.0, %v509
      %523 = vrot.lane.b32.xlu0 %v520, 96
      %v524 = vpop.permute.xlu0 %523
      %v526 = vmul.f32 %v521, %v524
      %528 = vrot.lane.b32.xlu0 %v375, 32
      %v529 = vpop.permute.xlu0 %528
      %v531 = vmul.f32 %v509, %v529
      %v532 = vadd.f32 %v526, %v531
      %534 = vrot.lane.b32.xlu0 %v532, 96
      %v535 = vpop.permute.xlu0 %534
      %vm537 = vcmask 254976
      %538 = vst.msk [vmem:[#allocation2] sm:$0x3] %vm537, %v535
      %539 = vst.msk [vmem:[%s361] sm:$0x3] %vm537, %v535
      %s540 = ssub.s32 1, %s20
      %s541 = smul.u32 %s540, %s21
      %s542 = ssub.s32 7, %s21
      %s543 = smul.u32 %s20, %s542
      %s544 = sadd.s32 %s541, %s543
      %p545 = scmp.lt.s32.totalorder %s20, 1
      %s546 = scalar_select %p545, %s20, 1
      %p547 = scmp.lt.s32.totalorder %s544, 7
      %s548 = scalar_select %p547, %s544, 7
      %s549 = smul.addr %s546, 8
      %s550 = sadd.s32 %s548, %s549
      %s551 = smul.addr %s550, 2
      %s552 = scalar_lea.vmem %s5, %s551
      // Predicated region
      $region45: #{seq2seq_forward.3} parent=39 // pred_check
        %p553 = pneg %p198
      $region46: #{seq2seq_forward.3} parent=39 // pred_check_branch
        %555 = sbr.rel (%p553) target = $region48
      $region47: #{seq2seq_forward.3} parent=39 // pred_region
        %s556 = ssub.s32 1, %s20
        %s557 = smul.u32 %s556, %s21
        %s558 = ssub.s32 7, %s21
        %s559 = smul.u32 %s20, %s558
        %s560 = sadd.s32 %s557, %s559
      $region48: #{seq2seq_forward.3} parent=39 // pred_fallthru
        _
    $region40: #{seq2seq_forward.3} parent=5 // pred_fallthru
      _
    %p561 = scmp.le.s32.totalorder 2, %s11
    // Predicated region
    $region49: #{seq2seq_forward.3} parent=5 // pred_check
      %p562 = pneg %p561
    $region50: #{seq2seq_forward.3} parent=5 // pred_check_branch
      %564 = sbr.rel (%p562) target = $region52
    $region51: #{seq2seq_forward.3} parent=5 // pred_region
      %s565 = ssub.s32 %s11, 2
      // Predicated region
      $region53: #{seq2seq_forward.3} parent=51 // pred_check
        %p566 = pneg %p204
      $region54: #{seq2seq_forward.3} parent=51 // pred_check_branch
        %568 = sbr.rel (%p566) target = $region56
      $region55: #{seq2seq_forward.3} parent=51 // pred_region
        %s569 = ssub.s32 1, %s22
        %s570 = smul.u32 %s569, %s23
        %s571 = ssub.s32 7, %s23
        %s572 = smul.u32 %s22, %s571
        %s573 = sadd.s32 %s570, %s572
        %p574 = scmp.lt.s32.totalorder %s22, 1
        %s575 = scalar_select %p574, %s22, 1
        %p576 = scmp.lt.s32.totalorder %s573, 7
        %s577 = scalar_select %p576, %s573, 7
        %s578 = smul.addr %s575, 8
        %s579 = sadd.s32 %s577, %s578
        %s580 = smul.addr %s579, 2
        %s581 = scalar_lea.vmem %s5, %s580
      $region56: #{seq2seq_forward.3} parent=51 // pred_fallthru
        _
    $region52: #{seq2seq_forward.3} parent=5 // pred_fallthru
      _
  $region6: #{seq2seq_forward.3} parent=0 // loop_footer
    %s15 = sadd.s32 1, %s11
  $region7: #{seq2seq_forward.3} parent=0 // loop_footer_branch
    %10 = sbr.rel target = $region3
  $region8: #{seq2seq_forward.3} parent=0 // loop_exit
    _

// kernel: seq2seq_forward.5
$region0: #{seq2seq_forward.5}
  #allocation0 [shape = 'u32[]', space=smem, size = 0x4, offset = 0x4, fixed_abs, tag = 'smem constant byte address 0x4 - core index']
  #allocation1 [shape = 'u32[144,128]{1,0:T(1,128)}', space=vmem, size = 0x12000, scoped, tag = 'internal scratch']
  #allocation2 [shape = 'f32[2,32]{1,0:T(2,128)}', space=vmem, size = 0x400, scoped, tag = 'scratch operand']
  #allocation3 [shape = 'f32[2,16]{1,0:T(2,128)}', space=vmem, size = 0x400, scoped, tag = 'scratch operand']
  #allocation4 [shape = 's32[1]{0}', space=sflag, size = 0x4, scoped, tag = 'scoped memory for seq2seq_forward.5']
  #allocation5 [shape = 'u8[512]{0}', space=smem, size = 0x200, scoped, tag = 'prefetched SMEM operand 0']
  %s0 = inlined_call_operand.vmem [shape: s32[6], index: 0, kind: input, shape index: {}]
  %s1 = inlined_call_operand.vmem [shape: s32[6,2,1], index: 1, kind: input, shape index: {}]
  %s2 = inlined_call_operand.vmem [shape: f32[2,16], index: 2, kind: input, shape index: {}]
  %s3 = inlined_call_operand.vmem [shape: f32[2,32], index: 3, kind: input, shape index: {}]
  %s4 = inlined_call_operand.vmem [shape: f32[8,2,32], index: 4, kind: input, shape index: {}]
  %s5 = inlined_call_operand.vmem [shape: f32[8,2,32], index: 5, kind: input, shape index: {}]
  %s6 = inlined_call_operand.vmem [shape: bf16[32,16], index: 6, kind: input, shape index: {}]
  %s7 = inlined_call_operand.vmem [shape: bf16[32,32], index: 7, kind: input, shape index: {}]
  %s8 = inlined_call_operand.vmem [shape: f32[1,1,32], index: 8, kind: input, shape index: {}]
  %s9 = inlined_call_operand.vmem [shape: bf16[48,96], index: 9, kind: input, shape index: {}]
  %s10 = inlined_call_operand.vmem [shape: bf16[32,96], index: 10, kind: input, shape index: {}]
  %s11 = inlined_call_operand.vmem [shape: f32[1,96], index: 11, kind: input, shape index: {}]
  %s12 = inlined_call_operand.vmem [shape: f32[1,96], index: 12, kind: input, shape index: {}]
  %s13 = inlined_call_operand.vmem [shape: bf16[64,32], index: 13, kind: input, shape index: {}]
  %s14 = inlined_call_operand.vmem [shape: f32[1,32], index: 14, kind: input, shape index: {}]
  %s15 = inlined_call_operand.hbm [shape: f32[6,2,32], index: 15, kind: output, shape index: {}]
  %s16 = sld [smem:[#allocation0]]
  $region93: #{seq2seq_forward.5} parent=0
    _
  %s18 = ssub.s32 1, %s16
  %s19 = scalar_select 0, %s18, %s16
  %s20 = sshll.u32 %s0, 4
  %s21 = int_to_ptr.vmem [resolvable:$true] %s20
  %23 = dma.vmem_to_smem %s21, 16, [#allocation5], [#allocation4]
  %24 = dma.done [#allocation4], 16
  %25 = sfence
  $region1: #{seq2seq_forward.5} parent=0
    #allocation6 [shape = 'u8[2048]{0}', space=vmem, size = 0x800, scoped, tag = 'output window, operand 0']
    #allocation7 [shape = 's32[2]{0}', space=sflag, size = 0x8, scoped, tag = 'scoped memory for seq2seq_forward.5']
    %26 = vsyncpa [#allocation7], 0
    %s27 = scalar_lea.sflag [#allocation7], 1
    %28 = vsyncpa %s27, 0
    loop: start=0, step=1, limit=8
    $region2: #{seq2seq_forward.5} parent=1 // loop_pre_header
      _
    $region3: #{seq2seq_forward.5} parent=1 // loop_header
      %s30 = sphi 0, %s34
      %p31 = scmp.ge.s32.totalorder %s30, 8
      %s38 = sphi 0, %s38
      %s40 = sphi 0, %s38
      %s41 = sphi 0, %s40
      %s55 = sphi 0, %s41
      %s59 = sphi 0, %s59
      %s61 = sphi 0, %s59
      %s62 = sphi 0, %s61
      %s76 = sphi 0, %s62
      %s80 = sphi 0, %s80
      %s82 = sphi 0, %s80
      %s83 = sphi 0, %s82
      %s97 = sphi 0, %s83
      %s101 = sphi 0, %s101
      %s103 = sphi 0, %s101
      %s104 = sphi 0, %s103
      %s118 = sphi 0, %s104
      %s122 = sphi 0, %s122
      %s124 = sphi 0, %s122
      %s125 = sphi 0, %s124
      %s139 = sphi 0, %s125
      %s143 = sphi 0, %s143
      %s145 = sphi 0, %s143
      %s146 = sphi 0, %s145
      %s160 = sphi 0, %s146
      %s164 = sphi 0, %s164
      %s166 = sphi 0, %s164
      %s167 = sphi 0, %s166
      %s181 = sphi 0, %s167
      %s185 = sphi 0, %s185
      %s187 = sphi 0, %s185
      %s188 = sphi 0, %s187
      %s202 = sphi 0, %s188
      %s206 = sphi 0, %s206
      %s208 = sphi 0, %s206
      %s209 = sphi 0, %s208
      %s223 = sphi 0, %s209
      %s227 = sphi 0, %s227
      %s229 = sphi 0, %s227
      %s230 = sphi 0, %s229
      %s244 = sphi 0, %s230
      %s248 = sphi 0, %s248
      %s250 = sphi 0, %s248
      %s251 = sphi 0, %s250
      %s265 = sphi 0, %s251
      %s269 = sphi 0, %s269
      %s271 = sphi 0, %s269
      %s272 = sphi 0, %s271
      %s286 = sphi 0, %s272
      %s290 = sphi 0, %s290
      %s292 = sphi 0, %s290
      %s293 = sphi 0, %s292
      %s307 = sphi 0, %s293
      %s311 = sphi 0, %s311
      %s313 = sphi 0, %s311
      %s314 = sphi 0, %s313
      %s328 = sphi 0, %s314
      %s334 = sphi 0, %s336
      %s337 = sphi 0, %s334
      %s338 = sphi 0, %s337
      %s354 = sphi 0, %s338
    $region4: #{seq2seq_forward.5} parent=1 // loop_header_branch
      %33 = sbr.rel (%p31) target = $region8
    $region5: #{seq2seq_forward.5} parent=1 // loop_body
      %s35 = ssub.s32 %s30, 1
      %s36 = ssub.s32 %s30, 2
      %s37 = sadd.s32 %s30, 1
      %s39 = sadd.s32 %s38, 1
      %p42 = scmp.eq.s32.totalorder %s30, 5
      %p43 = scmp.ne.s32.totalorder %s38, %s40
      %p44 = scmp.eq.s32.totalorder %s30, 0
      %p45 = por %p43, %p44
      %p46 = scmp.ne.s32.totalorder %s38, %s40
      %p47 = scmp.eq.s32.totalorder %s35, 5
      %p48 = por %p46, %p47
      %p49 = scmp.ne.s32.totalorder %s40, %s41
      %p50 = scmp.eq.s32.totalorder %s35, 0
      %p51 = por %p49, %p50
      %p52 = scmp.ne.s32.totalorder %s40, %s41
      %p53 = scmp.eq.s32.totalorder %s36, 5
      %p54 = por %p52, %p53
      %p56 = scmp.ne.s32.totalorder %s41, %s55
      %p57 = scmp.eq.s32.totalorder %s36, 0
      %p58 = por %p56, %p57
      %s60 = sadd.s32 %s59, 1
      %p63 = scmp.eq.s32.totalorder %s30, 5
      %p64 = scmp.ne.s32.totalorder %s59, %s61
      %p65 = scmp.eq.s32.totalorder %s30, 0
      %p66 = por %p64, %p65
      %p67 = scmp.ne.s32.totalorder %s59, %s61
      %p68 = scmp.eq.s32.totalorder %s35, 5
      %p69 = por %p67, %p68
      %p70 = scmp.ne.s32.totalorder %s61, %s62
      %p71 = scmp.eq.s32.totalorder %s35, 0
      %p72 = por %p70, %p71
      %p73 = scmp.ne.s32.totalorder %s61, %s62
      %p74 = scmp.eq.s32.totalorder %s36, 5
      %p75 = por %p73, %p74
      %p77 = scmp.ne.s32.totalorder %s62, %s76
      %p78 = scmp.eq.s32.totalorder %s36, 0
      %p79 = por %p77, %p78
      %s81 = sadd.s32 %s80, 1
      %p84 = scmp.eq.s32.totalorder %s30, 5
      %p85 = scmp.ne.s32.totalorder %s80, %s82
      %p86 = scmp.eq.s32.totalorder %s30, 0
      %p87 = por %p85, %p86
      %p88 = scmp.ne.s32.totalorder %s80, %s82
      %p89 = scmp.eq.s32.totalorder %s35, 5
      %p90 = por %p88, %p89
      %p91 = scmp.ne.s32.totalorder %s82, %s83
      %p92 = scmp.eq.s32.totalorder %s35, 0
      %p93 = por %p91, %p92
      %p94 = scmp.ne.s32.totalorder %s82, %s83
      %p95 = scmp.eq.s32.totalorder %s36, 5
      %p96 = por %p94, %p95
      %p98 = scmp.ne.s32.totalorder %s83, %s97
      %p99 = scmp.eq.s32.totalorder %s36, 0
      %p100 = por %p98, %p99
      %s102 = sadd.s32 %s101, 1
      %p105 = scmp.eq.s32.totalorder %s30, 5
      %p106 = scmp.ne.s32.totalorder %s101, %s103
      %p107 = scmp.eq.s32.totalorder %s30, 0
      %p108 = por %p106, %p107
      %p109 = scmp.ne.s32.totalorder %s101, %s103
      %p110 = scmp.eq.s32.totalorder %s35, 5
      %p111 = por %p109, %p110
      %p112 = scmp.ne.s32.totalorder %s103, %s104
      %p113 = scmp.eq.s32.totalorder %s35, 0
      %p114 = por %p112, %p113
      %p115 = scmp.ne.s32.totalorder %s103, %s104
      %p116 = scmp.eq.s32.totalorder %s36, 5
      %p117 = por %p115, %p116
      %p119 = scmp.ne.s32.totalorder %s104, %s118
      %p120 = scmp.eq.s32.totalorder %s36, 0
      %p121 = por %p119, %p120
      %s123 = sadd.s32 %s122, 1
      %p126 = scmp.eq.s32.totalorder %s30, 5
      %p127 = scmp.ne.s32.totalorder %s122, %s124
      %p128 = scmp.eq.s32.totalorder %s30, 0
      %p129 = por %p127, %p128
      %p130 = scmp.ne.s32.totalorder %s122, %s124
      %p131 = scmp.eq.s32.totalorder %s35, 5
      %p132 = por %p130, %p131
      %p133 = scmp.ne.s32.totalorder %s124, %s125
      %p134 = scmp.eq.s32.totalorder %s35, 0
      %p135 = por %p133, %p134
      %p136 = scmp.ne.s32.totalorder %s124, %s125
      %p137 = scmp.eq.s32.totalorder %s36, 5
      %p138 = por %p136, %p137
      %p140 = scmp.ne.s32.totalorder %s125, %s139
      %p141 = scmp.eq.s32.totalorder %s36, 0
      %p142 = por %p140, %p141
      %s144 = sadd.s32 %s143, 1
      %p147 = scmp.eq.s32.totalorder %s30, 5
      %p148 = scmp.ne.s32.totalorder %s143, %s145
      %p149 = scmp.eq.s32.totalorder %s30, 0
      %p150 = por %p148, %p149
      %p151 = scmp.ne.s32.totalorder %s143, %s145
      %p152 = scmp.eq.s32.totalorder %s35, 5
      %p153 = por %p151, %p152
      %p154 = scmp.ne.s32.totalorder %s145, %s146
      %p155 = scmp.eq.s32.totalorder %s35, 0
      %p156 = por %p154, %p155
      %p157 = scmp.ne.s32.totalorder %s145, %s146
      %p158 = scmp.eq.s32.totalorder %s36, 5
      %p159 = por %p157, %p158
      %p161 = scmp.ne.s32.totalorder %s146, %s160
      %p162 = scmp.eq.s32.totalorder %s36, 0
      %p163 = por %p161, %p162
      %s165 = sadd.s32 %s164, 1
      %p168 = scmp.eq.s32.totalorder %s30, 5
      %p169 = scmp.ne.s32.totalorder %s164, %s166
      %p170 = scmp.eq.s32.totalorder %s30, 0
      %p171 = por %p169, %p170
      %p172 = scmp.ne.s32.totalorder %s164, %s166
      %p173 = scmp.eq.s32.totalorder %s35, 5
      %p174 = por %p172, %p173
      %p175 = scmp.ne.s32.totalorder %s166, %s167
      %p176 = scmp.eq.s32.totalorder %s35, 0
      %p177 = por %p175, %p176
      %p178 = scmp.ne.s32.totalorder %s166, %s167
      %p179 = scmp.eq.s32.totalorder %s36, 5
      %p180 = por %p178, %p179
      %p182 = scmp.ne.s32.totalorder %s167, %s181
      %p183 = scmp.eq.s32.totalorder %s36, 0
      %p184 = por %p182, %p183
      %s186 = sadd.s32 %s185, 1
      %p189 = scmp.eq.s32.totalorder %s30, 5
      %p190 = scmp.ne.s32.totalorder %s185, %s187
      %p191 = scmp.eq.s32.totalorder %s30, 0
      %p192 = por %p190, %p191
      %p193 = scmp.ne.s32.totalorder %s185, %s187
      %p194 = scmp.eq.s32.totalorder %s35, 5
      %p195 = por %p193, %p194
      %p196 = scmp.ne.s32.totalorder %s187, %s188
      %p197 = scmp.eq.s32.totalorder %s35, 0
      %p198 = por %p196, %p197
      %p199 = scmp.ne.s32.totalorder %s187, %s188
      %p200 = scmp.eq.s32.totalorder %s36, 5
      %p201 = por %p199, %p200
      %p203 = scmp.ne.s32.totalorder %s188, %s202
      %p204 = scmp.eq.s32.totalorder %s36, 0
      %p205 = por %p203, %p204
      %s207 = sadd.s32 %s206, 1
      %p210 = scmp.eq.s32.totalorder %s30, 5
      %p211 = scmp.ne.s32.totalorder %s206, %s208
      %p212 = scmp.eq.s32.totalorder %s30, 0
      %p213 = por %p211, %p212
      %p214 = scmp.ne.s32.totalorder %s206, %s208
      %p215 = scmp.eq.s32.totalorder %s35, 5
      %p216 = por %p214, %p215
      %p217 = scmp.ne.s32.totalorder %s208, %s209
      %p218 = scmp.eq.s32.totalorder %s35, 0
      %p219 = por %p217, %p218
      %p220 = scmp.ne.s32.totalorder %s208, %s209
      %p221 = scmp.eq.s32.totalorder %s36, 5
      %p222 = por %p220, %p221
      %p224 = scmp.ne.s32.totalorder %s209, %s223
      %p225 = scmp.eq.s32.totalorder %s36, 0
      %p226 = por %p224, %p225
      %s228 = sadd.s32 %s227, 1
      %p231 = scmp.eq.s32.totalorder %s30, 5
      %p232 = scmp.ne.s32.totalorder %s227, %s229
      %p233 = scmp.eq.s32.totalorder %s30, 0
      %p234 = por %p232, %p233
      %p235 = scmp.ne.s32.totalorder %s227, %s229
      %p236 = scmp.eq.s32.totalorder %s35, 5
      %p237 = por %p235, %p236
      %p238 = scmp.ne.s32.totalorder %s229, %s230
      %p239 = scmp.eq.s32.totalorder %s35, 0
      %p240 = por %p238, %p239
      %p241 = scmp.ne.s32.totalorder %s229, %s230
      %p242 = scmp.eq.s32.totalorder %s36, 5
      %p243 = por %p241, %p242
      %p245 = scmp.ne.s32.totalorder %s230, %s244
      %p246 = scmp.eq.s32.totalorder %s36, 0
      %p247 = por %p245, %p246
      %s249 = sadd.s32 %s248, 1
      %p252 = scmp.eq.s32.totalorder %s30, 5
      %p253 = scmp.ne.s32.totalorder %s248, %s250
      %p254 = scmp.eq.s32.totalorder %s30, 0
      %p255 = por %p253, %p254
      %p256 = scmp.ne.s32.totalorder %s248, %s250
      %p257 = scmp.eq.s32.totalorder %s35, 5
      %p258 = por %p256, %p257
      %p259 = scmp.ne.s32.totalorder %s250, %s251
      %p260 = scmp.eq.s32.totalorder %s35, 0
      %p261 = por %p259, %p260
      %p262 = scmp.ne.s32.totalorder %s250, %s251
      %p263 = scmp.eq.s32.totalorder %s36, 5
      %p264 = por %p262, %p263
      %p266 = scmp.ne.s32.totalorder %s251, %s265
      %p267 = scmp.eq.s32.totalorder %s36, 0
      %p268 = por %p266, %p267
      %s270 = sadd.s32 %s269, 1
      %p273 = scmp.eq.s32.totalorder %s30, 5
      %p274 = scmp.ne.s32.totalorder %s269, %s271
      %p275 = scmp.eq.s32.totalorder %s30, 0
      %p276 = por %p274, %p275
      %p277 = scmp.ne.s32.totalorder %s269, %s271
      %p278 = scmp.eq.s32.totalorder %s35, 5
      %p279 = por %p277, %p278
      %p280 = scmp.ne.s32.totalorder %s271, %s272
      %p281 = scmp.eq.s32.totalorder %s35, 0
      %p282 = por %p280, %p281
      %p283 = scmp.ne.s32.totalorder %s271, %s272
      %p284 = scmp.eq.s32.totalorder %s36, 5
      %p285 = por %p283, %p284
      %p287 = scmp.ne.s32.totalorder %s272, %s286
      %p288 = scmp.eq.s32.totalorder %s36, 0
      %p289 = por %p287, %p288
      %s291 = sadd.s32 %s290, 1
      %p294 = scmp.eq.s32.totalorder %s30, 5
      %p295 = scmp.ne.s32.totalorder %s290, %s292
      %p296 = scmp.eq.s32.totalorder %s30, 0
      %p297 = por %p295, %p296
      %p298 = scmp.ne.s32.totalorder %s290, %s292
      %p299 = scmp.eq.s32.totalorder %s35, 5
      %p300 = por %p298, %p299
      %p301 = scmp.ne.s32.totalorder %s292, %s293
      %p302 = scmp.eq.s32.totalorder %s35, 0
      %p303 = por %p301, %p302
      %p304 = scmp.ne.s32.totalorder %s292, %s293
      %p305 = scmp.eq.s32.totalorder %s36, 5
      %p306 = por %p304, %p305
      %p308 = scmp.ne.s32.totalorder %s293, %s307
      %p309 = scmp.eq.s32.totalorder %s36, 0
      %p310 = por %p308, %p309
      %s312 = sadd.s32 %s311, 1
      %p315 = scmp.eq.s32.totalorder %s30, 5
      %p316 = scmp.ne.s32.totalorder %s311, %s313
      %p317 = scmp.eq.s32.totalorder %s30, 0
      %p318 = por %p316, %p317
      %p319 = scmp.ne.s32.totalorder %s311, %s313
      %p320 = scmp.eq.s32.totalorder %s35, 5
      %p321 = por %p319, %p320
      %p322 = scmp.ne.s32.totalorder %s313, %s314
      %p323 = scmp.eq.s32.totalorder %s35, 0
      %p324 = por %p322, %p323
      %p325 = scmp.ne.s32.totalorder %s313, %s314
      %p326 = scmp.eq.s32.totalorder %s36, 5
      %p327 = por %p325, %p326
      %p329 = scmp.ne.s32.totalorder %s314, %s328
      %p330 = scmp.eq.s32.totalorder %s36, 0
      %p331 = por %p329, %p330
      %s332 = ssub.s32 %s30, %s37
      %p333 = scmp.eq.s32.totalorder %s332, 0
      %s335 = sadd.s32 %s334, 1
      %s336 = scalar_select %p333, %s334, %s335
      %p339 = pneg %p333
      %p340 = scmp.eq.s32.totalorder %s30, 5
      %p341 = por %p339, %p340
      %p342 = scmp.ne.s32.totalorder %s334, %s337
      %p343 = scmp.eq.s32.totalorder %s30, 0
      %p344 = por %p342, %p343
      %p345 = scmp.ne.s32.totalorder %s334, %s337
      %p346 = scmp.eq.s32.totalorder %s35, 5
      %p347 = por %p345, %p346
      %p348 = scmp.ne.s32.totalorder %s337, %s338
      %p349 = scmp.eq.s32.totalorder %s35, 0
      %p350 = por %p348, %p349
      %p351 = scmp.ne.s32.totalorder %s337, %s338
      %p352 = scmp.eq.s32.totalorder %s36, 5
      %p353 = por %p351, %p352
      %p355 = scmp.ne.s32.totalorder %s338, %s354
      %p356 = scmp.eq.s32.totalorder %s36, 0
      %p357 = por %p355, %p356
      %p358 = scmp.le.s32.totalorder 1, %s30
      %p359 = scmp.lt.s32.totalorder %s30, 7
      %p360 = pnand %p358, %p359
      %p361 = pneg %p360
      // Predicated region
      $region9: #{seq2seq_forward.5} parent=5 // pred_check
        _
      $region10: #{seq2seq_forward.5} parent=5 // pred_check_branch
        %363 = sbr.rel (%p360) target = $region12
      $region11: #{seq2seq_forward.5} parent=5 // pred_region
        %s364 = ssub.s32 %s30, 1
        // Predicated region
        $region13: #{seq2seq_forward.5} parent=11 // pred_check
          %p365 = pneg %p51
        $region14: #{seq2seq_forward.5} parent=11 // pred_check_branch
          %367 = sbr.rel (%p365) target = $region16
        $region15: #{seq2seq_forward.5} parent=11 // pred_region
          _
        $region16: #{seq2seq_forward.5} parent=11 // pred_fallthru
          _
        // Predicated region
        $region17: #{seq2seq_forward.5} parent=11 // pred_check
          %p368 = pneg %p72
        $region18: #{seq2seq_forward.5} parent=11 // pred_check_branch
          %370 = sbr.rel (%p368) target = $region20
        $region19: #{seq2seq_forward.5} parent=11 // pred_region
          _
        $region20: #{seq2seq_forward.5} parent=11 // pred_fallthru
          _
        // Predicated region
        $region21: #{seq2seq_forward.5} parent=11 // pred_check
          %p371 = pneg %p93
        $region22: #{seq2seq_forward.5} parent=11 // pred_check_branch
          %373 = sbr.rel (%p371) target = $region24
        $region23: #{seq2seq_forward.5} parent=11 // pred_region
          _
        $region24: #{seq2seq_forward.5} parent=11 // pred_fallthru
          _
        // Predicated region
        $region25: #{seq2seq_forward.5} parent=11 // pred_check
          %p374 = pneg %p114
        $region26: #{seq2seq_forward.5} parent=11 // pred_check_branch
          %376 = sbr.rel (%p374) target = $region28
        $region27: #{seq2seq_forward.5} parent=11 // pred_region
          _
        $region28: #{seq2seq_forward.5} parent=11 // pred_fallthru
          _
        // Predicated region
        $region29: #{seq2seq_forward.5} parent=11 // pred_check
          %p377 = pneg %p135
        $region30: #{seq2seq_forward.5} parent=11 // pred_check_branch
          %379 = sbr.rel (%p377) target = $region32
        $region31: #{seq2seq_forward.5} parent=11 // pred_region
          _
        $region32: #{seq2seq_forward.5} parent=11 // pred_fallthru
          _
        // Predicated region
        $region33: #{seq2seq_forward.5} parent=11 // pred_check
          %p380 = pneg %p156
        $region34: #{seq2seq_forward.5} parent=11 // pred_check_branch
          %382 = sbr.rel (%p380) target = $region36
        $region35: #{seq2seq_forward.5} parent=11 // pred_region
          _
        $region36: #{seq2seq_forward.5} parent=11 // pred_fallthru
          _
        // Predicated region
        $region37: #{seq2seq_forward.5} parent=11 // pred_check
          %p383 = pneg %p177
        $region38: #{seq2seq_forward.5} parent=11 // pred_check_branch
          %385 = sbr.rel (%p383) target = $region40
        $region39: #{seq2seq_forward.5} parent=11 // pred_region
          _
        $region40: #{seq2seq_forward.5} parent=11 // pred_fallthru
          _
        // Predicated region
        $region41: #{seq2seq_forward.5} parent=11 // pred_check
          %p386 = pneg %p198
        $region42: #{seq2seq_forward.5} parent=11 // pred_check_branch
          %388 = sbr.rel (%p386) target = $region44
        $region43: #{seq2seq_forward.5} parent=11 // pred_region
          _
        $region44: #{seq2seq_forward.5} parent=11 // pred_fallthru
          _
        // Predicated region
        $region45: #{seq2seq_forward.5} parent=11 // pred_check
          %p389 = pneg %p219
        $region46: #{seq2seq_forward.5} parent=11 // pred_check_branch
          %391 = sbr.rel (%p389) target = $region48
        $region47: #{seq2seq_forward.5} parent=11 // pred_region
          _
        $region48: #{seq2seq_forward.5} parent=11 // pred_fallthru
          _
        // Predicated region
        $region49: #{seq2seq_forward.5} parent=11 // pred_check
          %p392 = pneg %p240
        $region50: #{seq2seq_forward.5} parent=11 // pred_check_branch
          %394 = sbr.rel (%p392) target = $region52
        $region51: #{seq2seq_forward.5} parent=11 // pred_region
          _
        $region52: #{seq2seq_forward.5} parent=11 // pred_fallthru
          _
        // Predicated region
        $region53: #{seq2seq_forward.5} parent=11 // pred_check
          %p395 = pneg %p261
        $region54: #{seq2seq_forward.5} parent=11 // pred_check_branch
          %397 = sbr.rel (%p395) target = $region56
        $region55: #{seq2seq_forward.5} parent=11 // pred_region
          _
        $region56: #{seq2seq_forward.5} parent=11 // pred_fallthru
          _
        // Predicated region
        $region57: #{seq2seq_forward.5} parent=11 // pred_check
          %p398 = pneg %p282
        $region58: #{seq2seq_forward.5} parent=11 // pred_check_branch
          %400 = sbr.rel (%p398) target = $region60
        $region59: #{seq2seq_forward.5} parent=11 // pred_region
          _
        $region60: #{seq2seq_forward.5} parent=11 // pred_fallthru
          _
        // Predicated region
        $region61: #{seq2seq_forward.5} parent=11 // pred_check
          %p401 = pneg %p303
        $region62: #{seq2seq_forward.5} parent=11 // pred_check_branch
          %403 = sbr.rel (%p401) target = $region64
        $region63: #{seq2seq_forward.5} parent=11 // pred_region
          _
        $region64: #{seq2seq_forward.5} parent=11 // pred_fallthru
          _
        // Predicated region
        $region65: #{seq2seq_forward.5} parent=11 // pred_check
          %p404 = pneg %p324
        $region66: #{seq2seq_forward.5} parent=11 // pred_check_branch
          %406 = sbr.rel (%p404) target = $region68
        $region67: #{seq2seq_forward.5} parent=11 // pred_region
          _
        $region68: #{seq2seq_forward.5} parent=11 // pred_fallthru
          _
      $region12: #{seq2seq_forward.5} parent=5 // pred_fallthru
        _
      %p407 = scmp.lt.s32.totalorder %s30, 6
      // Predicated region
      $region69: #{seq2seq_forward.5} parent=5 // pred_check
        %p408 = pneg %p407
      $region70: #{seq2seq_forward.5} parent=5 // pred_check_branch
        %410 = sbr.rel (%p408) target = $region72
      $region71: #{seq2seq_forward.5} parent=5 // pred_region
        _
      $region72: #{seq2seq_forward.5} parent=5 // pred_fallthru
        _
      %p411 = scmp.le.s32.totalorder 1, %s30
      %p412 = scmp.lt.s32.totalorder %s30, 7
      %p413 = pnand %p411, %p412
      %p414 = pneg %p413
      // Predicated region
      $region73: #{seq2seq_forward.5} parent=5 // pred_check
        _
      $region74: #{seq2seq_forward.5} parent=5 // pred_check_branch
        %416 = sbr.rel (%p413) target = $region76
      $region75: #{seq2seq_forward.5} parent=5 // pred_region
        %s417 = ssub.s32 %s30, 1
        %p418 = pneg %p51
        %p419 = pneg %p48
        %p420 = pneg %p72
        %p421 = pneg %p69
        %p422 = pneg %p93
        %p423 = pneg %p90
        %p424 = pneg %p114
        %p425 = pneg %p111
        %p426 = pneg %p135
        %p427 = pneg %p132
        %p428 = pneg %p156
        %p429 = pneg %p153
        %p430 = pneg %p177
        %p431 = pneg %p174
        %p432 = pneg %p198
        %p433 = pneg %p195
        %p434 = pneg %p219
        %p435 = pneg %p216
        %p436 = pneg %p240
        %p437 = pneg %p237
        %p438 = pneg %p261
        %p439 = pneg %p258
        %p440 = pneg %p282
        %p441 = pneg %p279
        %p442 = pneg %p303
        %p443 = pneg %p300
        %p444 = pneg %p324
        %p445 = pneg %p321
        %p446 = pneg %p350
        %p447 = pneg %p347
        %s448 = sand.u32 %s337, 1
        %s449 = scalar_lea.sflag [#allocation7], %s448
        %s450 = sand.u32 %s337, 1
        %s451 = smul.addr %s450, 2
        %s452 = scalar_lea.vmem [#allocation6], %s451
        %p454 = scmp.eq.s32.totalorder %s35, 0
        // Predicated region
        $region77: #{seq2seq_forward.5} parent=75 // pred_check
          %p455 = pneg %p454
        $region78: #{seq2seq_forward.5} parent=75 // pred_check_branch
          %457 = sbr.rel (%p455) target = $region80
        $region79: #{seq2seq_forward.5} parent=75 // pred_region
          %v458 = vld [vmem:[%s3] sm:$0x3]
          %vm459 = vcmask 254976
          %460 = vst.msk [vmem:[#allocation2] sm:$0x3] %vm459, %v458
          %v461 = vld [vmem:[%s2] sm:$0x3]
          %vm462 = vcmask 123904
          %463 = vst.msk [vmem:[#allocation3] sm:$0x3] %vm462, %v461
        $region80: #{seq2seq_forward.5} parent=75 // pred_fallthru
          _
        %v464 = vld [vmem:[#allocation2] sm:$0x3]
        %v465 = vld [vmem:[#allocation3] sm:$0x3]
        %v466 = vpack.c.bf16 %v464, %v464
        %v467 = vld [vmem:[%s7] sm:$0xf]
        %v468 = vld [vmem:[%s7 + $0x4] sm:$0xf]
        %v469 = vld [vmem:[%s7 + $0x8] sm:$0xf]
        %v470 = vld [vmem:[%s7 + $0xc] sm:$0xf]
        %v475 = vunpack.c.l.b16 %v467
        %v476 = vunpack.c.l.b16 %v468
        %v477 = vunpack.c.l.b16 %v469
        %v478 = vunpack.c.l.b16 %v470
        %v479 = vpack.c.b16 %v476, %v475
        %v480 = vpack.c.b16 %v478, %v477
        %vm483 = vcmask 261120
        %v485 = vsel %vm483, %v466, 0
        %487 = vmatprep.subr.bf16.mxu0 0
        %488 = vmatpush1.bf16.msra.mxu0 %v479
        %489 = vmatprep.subr.bf16.mxu0 0
        %490 = vmatpush1.bf16.msra.mxu0 %v480
        %491 = vmatprep.subr.bf16.mxu0 0
        %492 = vmatpush1.bf16.msra.mxu0 0
        %493 = vmatprep.subr.bf16.mxu0 0
        %494 = vmatpush1.bf16.msra.mxu0 0
        %495 = vmatprep.subr.bf16.mxu0 0
        %496 = vmatpush1.bf16.msra.mxu0 0
        %497 = vmatprep.subr.bf16.mxu0 0
        %498 = vmatpush1.bf16.msra.mxu0 0
        %499 = vmatprep.subr.bf16.mxu0 0
        %500 = vmatpush1.bf16.msra.mxu0 0
        %501 = vmatprep.subr.bf16.mxu0 0
        %502 = vmatpush1.bf16.msra.mxu0 0
        %503 = vmatprep.subr.bf16.mxu0 0
        %504 = vmatpush1.bf16.msra.mxu0 0
        %505 = vmatprep.subr.bf16.mxu0 0
        %506 = vmatpush1.bf16.msra.mxu0 0
        %507 = vmatprep.subr.bf16.mxu0 0
        %508 = vmatpush1.bf16.msra.mxu0 0
        %509 = vmatprep.subr.bf16.mxu0 0
        %510 = vmatpush1.bf16.msra.mxu0 0
        %511 = vmatprep.subr.bf16.mxu0 0
        %512 = vmatpush1.bf16.msra.mxu0 0
        %513 = vmatprep.subr.bf16.mxu0 0
        %514 = vmatpush1.bf16.msra.mxu0 0
        %515 = vmatprep.subr.bf16.mxu0 0
        %516 = vmatpush1.bf16.msra.mxu0 0
        %517 = vmatprep.subr.bf16.mxu0 0
        %518 = vmatpush1.bf16.msra.mxu0 0
        %519 = vmatprep.mubr.bf16.mxu0 0
        %520 = vmatmul.mubr.bf16.gmra.mrb[0].mxu0 %v485
        %v521 = vpop.f32.mrb[0].mxu0
        %v522 = vadd.f32 0.0, %v521
        %v523 = vpop.f32.mrb[0].mxu0
        %v524 = vpop.f32.mrb[0].mxu0
        %v525 = vpop.f32.mrb[0].mxu0
        %526 = vdwg.mxu0
        %v527 = vld [vmem:[%s5] sm:$0x3]
        %v528 = vld [vmem:[%s5 + $0x2] sm:$0x3]
        %v529 = vld [vmem:[%s5 + $0x4] sm:$0x3]
        %v530 = vld [vmem:[%s5 + $0x6] sm:$0x3]
        %v531 = vld [vmem:[%s5 + $0x8] sm:$0x3]
        %v532 = vld [vmem:[%s5 + $0xa] sm:$0x3]
        %v533 = vld [vmem:[%s5 + $0xc] sm:$0x3]
        %v534 = vld [vmem:[%s5 + $0xe] sm:$0x3]
        %v535 = vadd.f32 %v527, %v522
        %v536 = vadd.f32 %v528, %v522
        %v537 = vadd.f32 %v529, %v522
        %v538 = vadd.f32 %v530, %v522
        %v539 = vadd.f32 %v531, %v522
        %v540 = vadd.f32 %v532, %v522
        %v541 = vadd.f32 %v533, %v522
        %v542 = vadd.f32 %v534, %v522
        %v543 = vmax.f32 %v535, 0.0
        %v544 = vmax.f32 %v536, 0.0
        %v545 = vmax.f32 %v537, 0.0
        %v546 = vmax.f32 %v538, 0.0
        %v547 = vmax.f32 %v539, 0.0
        %v548 = vmax.f32 %v540, 0.0
        %v549 = vmax.f32 %v541, 0.0
        %v550 = vmax.f32 %v542, 0.0
        %v551 = vld [vmem:[%s8] sm:$0x1]
        %v553 = vlaneseq
        %v554 = vshrl.u32 %v553, 7
        %v555 = vsub.s32 0, %v554
        %v556 = vrot.slane %v551, %v555
        %v558 = vmul.f32 %v543, %v556
        %v559 = vmul.f32 %v544, %v556
        %v560 = vmul.f32 %v545, %v556
        %v561 = vmul.f32 %v546, %v556
        %v562 = vmul.f32 %v547, %v556
        %v563 = vmul.f32 %v548, %v556
        %v564 = vmul.f32 %v549, %v556
        %v565 = vmul.f32 %v550, %v556
        %vm566 = vcmask 254976
        %v567 = vsel %vm566, %v558, 0.0
        %568 = vadd.xlane.f32.xlu0 %v567
        %v569 = vpop.xlane.xlu0 %568
        %v570 = vsel %vm566, %v559, 0.0
        %571 = vadd.xlane.f32.xlu0 %v570
        %v572 = vpop.xlane.xlu0 %571
        %v573 = vsel %vm566, %v560, 0.0
        %574 = vadd.xlane.f32.xlu0 %v573
        %v575 = vpop.xlane.xlu0 %574
        %v576 = vsel %vm566, %v561, 0.0
        %577 = vadd.xlane.f32.xlu0 %v576
        %v578 = vpop.xlane.xlu0 %577
        %v579 = vsel %vm566, %v562, 0.0
        %580 = vadd.xlane.f32.xlu0 %v579
        %v581 = vpop.xlane.xlu0 %580
        %v582 = vsel %vm566, %v563, 0.0
        %583 = vadd.xlane.f32.xlu0 %v582
        %v584 = vpop.xlane.xlu0 %583
        %v585 = vsel %vm566, %v564, 0.0
        %586 = vadd.xlane.f32.xlu0 %v585
        %v587 = vpop.xlane.xlu0 %586
        %v588 = vsel %vm566, %v565, 0.0
        %589 = vadd.xlane.f32.xlu0 %v588
        %v590 = vpop.xlane.xlu0 %589
        %vm591 = vcmask 1041408
        %v592 = vsel %vm591, %v569, -inf
        %v593 = vsel %vm591, %v572, -inf
        %v594 = vsel %vm591, %v575, -inf
        %v595 = vsel %vm591, %v578, -inf
        %v596 = vsel %vm591, %v581, -inf
        %v597 = vmax.f32 %v592, %v596
        %v598 = vsel %vm591, %v584, -inf
        %v599 = vmax.f32 %v593, %v598
        %v600 = vsel %vm591, %v587, -inf
        %v601 = vmax.f32 %v594, %v600
        %v602 = vsel %vm591, %v590, -inf
        %v603 = vmax.f32 %v595, %v602
        %v604 = vmax.f32 %v597, %v599
        %v605 = vmax.f32 %v601, %v603
        %v606 = vmax.f32 %v604, %v605
        %v607 = vsub.f32 %v569, %v606
        %v608 = vsub.f32 %v572, %v606
        %v609 = vsub.f32 %v575, %v606
        %v610 = vsub.f32 %v578, %v606
        %v611 = vsub.f32 %v581, %v606
        %v612 = vsub.f32 %v584, %v606
        %v613 = vsub.f32 %v587, %v606
        %v614 = vsub.f32 %v590, %v606
        %v615 = vmul.f32 %v607, 1.442695
        %v616 = vpow.pop %v615
        %v617 = vmul.f32 %v608, 1.442695
        %v618 = vpow.pop %v617
        %v619 = vmul.f32 %v609, 1.442695
        %v620 = vpow.pop %v619
        %v621 = vmul.f32 %v610, 1.442695
        %v622 = vpow.pop %v621
        %v623 = vmul.f32 %v611, 1.442695
        %v624 = vpow.pop %v623
        %v625 = vmul.f32 %v612, 1.442695
        %v626 = vpow.pop %v625
        %v627 = vmul.f32 %v613, 1.442695
        %v628 = vpow.pop %v627
        %v629 = vmul.f32 %v614, 1.442695
        %v630 = vpow.pop %v629
        %v631 = vsel %vm591, %v616, 0.0
        %v632 = vsel %vm591, %v618, 0.0
        %v633 = vadd.f32 %v631, %v632
        %v634 = vsel %vm591, %v620, 0.0
        %v635 = vadd.f32 %v633, %v634
        %v636 = vsel %vm591, %v622, 0.0
        %v637 = vadd.f32 %v635, %v636
        %v638 = vsel %vm591, %v624, 0.0
        %v639 = vadd.f32 %v637, %v638
        %v640 = vsel %vm591, %v626, 0.0
        %v641 = vadd.f32 %v639, %v640
        %v642 = vsel %vm591, %v628, 0.0
        %v643 = vadd.f32 %v641, %v642
        %v644 = vsel %vm591, %v630, 0.0
        %v645 = vadd.f32 %v643, %v644
        %v646 = vrcp.pop %v645
        %v647 = vmul.f32 %v616, %v646
        %v648 = vmul.f32 %v618, %v646
        %v649 = vmul.f32 %v620, %v646
        %v650 = vmul.f32 %v622, %v646
        %v651 = vmul.f32 %v624, %v646
        %v652 = vmul.f32 %v626, %v646
        %v653 = vmul.f32 %v628, %v646
        %v654 = vmul.f32 %v630, %v646
        %v655 = vld [vmem:[%s4] sm:$0x3]
        %v656 = vld [vmem:[%s4 + $0x2] sm:$0x3]
        %v657 = vld [vmem:[%s4 + $0x4] sm:$0x3]
        %v658 = vld [vmem:[%s4 + $0x6] sm:$0x3]
        %v659 = vld [vmem:[%s4 + $0x8] sm:$0x3]
        %v660 = vld [vmem:[%s4 + $0xa] sm:$0x3]
        %v661 = vld [vmem:[%s4 + $0xc] sm:$0x3]
        %v662 = vld [vmem:[%s4 + $0xe] sm:$0x3]
        %v663 = vmul.f32 %v647, %v655
        %v664 = vmul.f32 %v648, %v656
        %v665 = vmul.f32 %v649, %v657
        %v666 = vmul.f32 %v650, %v658
        %v667 = vmul.f32 %v651, %v659
        %v668 = vmul.f32 %v652, %v660
        %v669 = vmul.f32 %v653, %v661
        %v670 = vmul.f32 %v654, %v662
        %v671 = vsel %vm566, %v663, 0.0
        %v672 = vsel %vm566, %v664, 0.0
        %v673 = vadd.f32 %v671, %v672
        %v674 = vsel %vm566, %v665, 0.0
        %v675 = vadd.f32 %v673, %v674
        %v676 = vsel %vm566, %v666, 0.0
        %v677 = vadd.f32 %v675, %v676
        %v678 = vsel %vm566, %v667, 0.0
        %v679 = vadd.f32 %v677, %v678
        %v680 = vsel %vm566, %v668, 0.0
        %v681 = vadd.f32 %v679, %v680
        %v682 = vsel %vm566, %v669, 0.0
        %v683 = vadd.f32 %v681, %v682
        %v684 = vsel %vm566, %v670, 0.0
        %v685 = vadd.f32 %v683, %v684
        %687 = vrot.lane.b32.xlu0 %v685, 16
        %v688 = vpop.permute.xlu0 %687
        %vm690 = vcmask 130048
        %v691 = vsel %vm690, %v465, %v688
        %v692 = vpack.c.bf16 %v691, %v691
        %v693 = vld [vmem:[%s9] sm:$0xf]
        %v694 = vld [vmem:[%s9 + $0x4] sm:$0xf]
        %v695 = vld [vmem:[%s9 + $0x8] sm:$0xf]
        %v696 = vld [vmem:[%s9 + $0xc] sm:$0xf]
        %v697 = vld [vmem:[%s9 + $0x10] sm:$0xf]
        %v698 = vld [vmem:[%s9 + $0x14] sm:$0xf]
        %v699 = vld [vmem:[%s11] sm:$0x1]
        %v701 = vlaneseq
        %v702 = vshrl.u32 %v701, 7
        %v703 = vsub.s32 0, %v702
        %v704 = vrot.slane %v699, %v703
        %v712 = vunpack.c.l.b16 %v693
        %v713 = vunpack.c.l.b16 %v694
        %v714 = vunpack.c.l.b16 %v695
        %v715 = vunpack.c.l.b16 %v696
        %v716 = vunpack.c.l.b16 %v697
        %v717 = vunpack.c.l.b16 %v698
        %v718 = vpack.c.b16 %v713, %v712
        %v719 = vpack.c.b16 %v715, %v714
        %v720 = vpack.c.b16 %v717, %v716
        %vm724 = vcmask 392192
        %v726 = vsel %vm724, %v692, 0
        %728 = vmatprep.subr.bf16.mxu0 0
        %729 = vmatpush1.bf16.msra.mxu0 %v718
        %730 = vmatprep.subr.bf16.mxu0 0
        %731 = vmatpush1.bf16.msra.mxu0 %v719
        %732 = vmatprep.subr.bf16.mxu0 0
        %733 = vmatpush1.bf16.msra.mxu0 %v720
        %734 = vmatprep.subr.bf16.mxu0 0
        %735 = vmatpush1.bf16.msra.mxu0 0
        %736 = vmatprep.subr.bf16.mxu0 0
        %737 = vmatpush1.bf16.msra.mxu0 0
        %738 = vmatprep.subr.bf16.mxu0 0
        %739 = vmatpush1.bf16.msra.mxu0 0
        %740 = vmatprep.subr.bf16.mxu0 0
        %741 = vmatpush1.bf16.msra.mxu0 0
        %742 = vmatprep.subr.bf16.mxu0 0
        %743 = vmatpush1.bf16.msra.mxu0 0
        %744 = vmatprep.subr.bf16.mxu0 0
        %745 = vmatpush1.bf16.msra.mxu0 0
        %746 = vmatprep.subr.bf16.mxu0 0
        %747 = vmatpush1.bf16.msra.mxu0 0
        %748 = vmatprep.subr.bf16.mxu0 0
        %749 = vmatpush1.bf16.msra.mxu0 0
        %750 = vmatprep.subr.bf16.mxu0 0
        %751 = vmatpush1.bf16.msra.mxu0 0
        %752 = vmatprep.subr.bf16.mxu0 0
        %753 = vmatpush1.bf16.msra.mxu0 0
        %754 = vmatprep.subr.bf16.mxu0 0
        %755 = vmatpush1.bf16.msra.mxu0 0
        %756 = vmatprep.subr.bf16.mxu0 0
        %757 = vmatpush1.bf16.msra.mxu0 0
        %758 = vmatprep.subr.bf16.mxu0 0
        %759 = vmatpush1.bf16.msra.mxu0 0
        %760 = vmatprep.mubr.bf16.mxu0 0
        %761 = vmatmul.mubr.bf16.gmra.mrb[0].mxu0 %v726
        %v762 = vpop.f32.mrb[0].mxu0
        %v763 = vadd.f32 %v704, %v762
        %v764 = vpop.f32.mrb[0].mxu0
        %v765 = vpop.f32.mrb[0].mxu0
        %v766 = vpop.f32.mrb[0].mxu0
        %767 = vdwg.mxu0
        %v768 = vld [vmem:[%s10] sm:$0xf]
        %v769 = vld [vmem:[%s10 + $0x4] sm:$0xf]
        %v770 = vld [vmem:[%s10 + $0x8] sm:$0xf]
        %v771 = vld [vmem:[%s10 + $0xc] sm:$0xf]
        %v772 = vld [vmem:[%s12] sm:$0x1]
        %v774 = vlaneseq
        %v775 = vshrl.u32 %v774, 7
        %v776 = vsub.s32 0, %v775
        %v777 = vrot.slane %v772, %v776
        %v783 = vunpack.c.l.b16 %v768
        %v784 = vunpack.c.l.b16 %v769
        %v785 = vunpack.c.l.b16 %v770
        %v786 = vunpack.c.l.b16 %v771
        %v787 = vpack.c.b16 %v784, %v783
        %v788 = vpack.c.b16 %v786, %v785
        %791 = vmatprep.subr.bf16.mxu0 0
        %792 = vmatpush1.bf16.msra.mxu0 %v787
        %793 = vmatprep.subr.bf16.mxu0 0
        %794 = vmatpush1.bf16.msra.mxu0 %v788
        %795 = vmatprep.subr.bf16.mxu0 0
        %796 = vmatpush1.bf16.msra.mxu0 0
        %797 = vmatprep.subr.bf16.mxu0 0
        %798 = vmatpush1.bf16.msra.mxu0 0
        %799 = vmatprep.subr.bf16.mxu0 0
        %800 = vmatpush1.bf16.msra.mxu0 0
        %801 = vmatprep.subr.bf16.mxu0 0
        %802 = vmatpush1.bf16.msra.mxu0 0
        %803 = vmatprep.subr.bf16.mxu0 0
        %804 = vmatpush1.bf16.msra.mxu0 0
        %805 = vmatprep.subr.bf16.mxu0 0
        %806 = vmatpush1.bf16.msra.mxu0 0
        %807 = vmatprep.subr.bf16.mxu0 0
        %808 = vmatpush1.bf16.msra.mxu0 0
        %809 = vmatprep.subr.bf16.mxu0 0
        %810 = vmatpush1.bf16.msra.mxu0 0
        %811 = vmatprep.subr.bf16.mxu0 0
        %812 = vmatpush1.bf16.msra.mxu0 0
        %813 = vmatprep.subr.bf16.mxu0 0
        %814 = vmatpush1.bf16.msra.mxu0 0
        %815 = vmatprep.subr.bf16.mxu0 0
        %816 = vmatpush1.bf16.msra.mxu0 0
        %817 = vmatprep.subr.bf16.mxu0 0
        %818 = vmatpush1.bf16.msra.mxu0 0
        %819 = vmatprep.subr.bf16.mxu0 0
        %820 = vmatpush1.bf16.msra.mxu0 0
        %821 = vmatprep.subr.bf16.mxu0 0
        %822 = vmatpush1.bf16.msra.mxu0 0
        %823 = vmatprep.mubr.bf16.mxu0 0
        %824 = vmatmul.mubr.bf16.gmra.mrb[0].mxu0 %v485
        %v825 = vpop.f32.mrb[0].mxu0
        %v826 = vadd.f32 %v777, %v825
        %v827 = vpop.f32.mrb[0].mxu0
        %v828 = vpop.f32.mrb[0].mxu0
        %v829 = vpop.f32.mrb[0].mxu0
        %830 = vdwg.mxu0
        %v831 = vadd.f32 %v763, %v826
        %v832 = vxor.u32 %v831, 2147483648
        %v833 = vmul.f32 %v832, 1.442695
        %v834 = vpow.pop %v833
        %v835 = vadd.f32 %v834, 1.0
        %v836 = vrcp.pop %v835
        %v837 = vmul.f32 1.0, %v836
        %839 = vrot.lane.b32.xlu0 %v826, 64
        %v840 = vpop.permute.xlu0 %839
        %v842 = vmul.f32 %v837, %v840
        %844 = vrot.lane.b32.xlu0 %v842, 64
        %v845 = vpop.permute.xlu0 %844
        %v847 = vadd.f32 %v763, %v845
        %v848 = vtanh.pop %v847
        %v849 = vsub.f32 1.0, %v837
        %851 = vrot.lane.b32.xlu0 %v848, 96
        %v852 = vpop.permute.xlu0 %851
        %v854 = vmul.f32 %v849, %v852
        %856 = vrot.lane.b32.xlu0 %v464, 32
        %v857 = vpop.permute.xlu0 %856
        %v859 = vmul.f32 %v837, %v857
        %v860 = vadd.f32 %v854, %v859
        %862 = vrot.lane.b32.xlu0 %v860, 96
        %v863 = vpop.permute.xlu0 %862
        %865 = vrot.lane.b32.xlu0 %v685, 32
        %v866 = vpop.permute.xlu0 %865
        %v868 = vsel %vm483, %v863, %v866
        %v869 = vpack.c.bf16 %v868, %v868
        %v870 = vld [vmem:[%s13] sm:$0xf]
        %v871 = vld [vmem:[%s13 + $0x4] sm:$0xf]
        %v872 = vld [vmem:[%s13 + $0x8] sm:$0xf]
        %v873 = vld [vmem:[%s13 + $0xc] sm:$0xf]
        %v874 = vld [vmem:[%s13 + $0x10] sm:$0xf]
        %v875 = vld [vmem:[%s13 + $0x14] sm:$0xf]
        %v876 = vld [vmem:[%s13 + $0x18] sm:$0xf]
        %v877 = vld [vmem:[%s13 + $0x1c] sm:$0xf]
        %v878 = vld [vmem:[%s14] sm:$0x1]
        %v880 = vlaneseq
        %v881 = vshrl.u32 %v880, 7
        %v882 = vsub.s32 0, %v881
        %v883 = vrot.slane %v878, %v882
        %v893 = vunpack.c.l.b16 %v870
        %v894 = vunpack.c.l.b16 %v871
        %v895 = vunpack.c.l.b16 %v872
        %v896 = vunpack.c.l.b16 %v873
        %v897 = vunpack.c.l.b16 %v874
        %v898 = vunpack.c.l.b16 %v875
        %v899 = vunpack.c.l.b16 %v876
        %v900 = vunpack.c.l.b16 %v877
        %v901 = vpack.c.b16 %v894, %v893
        %v902 = vpack.c.b16 %v896, %v895
        %v903 = vpack.c.b16 %v898, %v897
        %v904 = vpack.c.b16 %v900, %v899
        %vm909 = vcmask 523264
        %v911 = vsel %vm909, %v869, 0
        %913 = vmatprep.subr.bf16.mxu0 0
        %914 = vmatpush1.bf16.msra.mxu0 %v901
        %915 = vmatprep.subr.bf16.mxu0 0
        %916 = vmatpush1.bf16.msra.mxu0 %v902
        %917 = vmatprep.subr.bf16.mxu0 0
        %918 = vmatpush1.bf16.msra.mxu0 %v903
        %919 = vmatprep.subr.bf16.mxu0 0
        %920 = vmatpush1.bf16.msra.mxu0 %v904
        %921 = vmatprep.subr.bf16.mxu0 0
        %922 = vmatpush1.bf16.msra.mxu0 0
        %923 = vmatprep.subr.bf16.mxu0 0
        %924 = vmatpush1.bf16.msra.mxu0 0
        %925 = vmatprep.subr.bf16.mxu0 0
        %926 = vmatpush1.bf16.msra.mxu0 0
        %927 = vmatprep.subr.bf16.mxu0 0
        %928 = vmatpush1.bf16.msra.mxu0 0
        %929 = vmatprep.subr.bf16.mxu0 0
        %930 = vmatpush1.bf16.msra.mxu0 0
        %931 = vmatprep.subr.bf16.mxu0 0
        %932 = vmatpush1.bf16.msra.mxu0 0
        %933 = vmatprep.subr.bf16.mxu0 0
        %934 = vmatpush1.bf16.msra.mxu0 0
        %935 = vmatprep.subr.bf16.mxu0 0
        %936 = vmatpush1.bf16.msra.mxu0 0
        %937 = vmatprep.subr.bf16.mxu0 0
        %938 = vmatpush1.bf16.msra.mxu0 0
        %939 = vmatprep.subr.bf16.mxu0 0
        %940 = vmatpush1.bf16.msra.mxu0 0
        %941 = vmatprep.subr.bf16.mxu0 0
        %942 = vmatpush1.bf16.msra.mxu0 0
        %943 = vmatprep.subr.bf16.mxu0 0
        %944 = vmatpush1.bf16.msra.mxu0 0
        %945 = vmatprep.mubr.bf16.mxu0 0
        %946 = vmatmul.mubr.bf16.gmra.mrb[0].mxu0 %v911
        %v947 = vpop.f32.mrb[0].mxu0
        %v948 = vadd.f32 %v883, %v947
        %v949 = vpop.f32.mrb[0].mxu0
        %v950 = vpop.f32.mrb[0].mxu0
        %v951 = vpop.f32.mrb[0].mxu0
        %952 = vdwg.mxu0
        %953 = vst.msk [vmem:[%s452] sm:$0x3] %vm566, %v948
        %v954 = vlaneseq
        %v955 = vand.u32 %v954, 127
        %v956 = vsel %vm566, %v948, -inf
        %957 = vmax.xlane.f32.xlu0 %v956
        %v958 = vpop.xlane.xlu0 %957
        %vm959 = vcmp.ge.f32.partialorder %v948, %v958
        %v960 = vsel %vm959, %v955, 32
        %v961 = vsel %vm566, %v960, 2147483647
        %v962 = vand.u32 %v961, 65535
        %v963 = vshra.s32 %v961, 16
        %v964 = vcvt.s32.f32 %v962
        %v965 = vcvt.s32.f32 %v963
        %966 = vmin.xlane.f32.xlu0 %v965
        %v967 = vpop.xlane.xlu0 %966
        %vm968 = vcmp.eq.f32.partialorder %v965, %v967
        %v969 = vsel %vm968, %v964, inf
        %970 = vmin.xlane.f32.xlu0 %v969
        %v971 = vpop.xlane.xlu0 %970
        %v972 = vcvt.f32.s32 %v971
        %v973 = vcvt.f32.s32 %v967
        %v974 = vshll.u32 %v973, 16
        %v975 = vadd.s32 %v974, %v972
        %s976 = sld [smem:[#allocation5 + %s35]]
        %s977 = smul.u32 %s35, 2
        %s978 = scalar_lea.vmem %s1, %s977
        %v979 = vld [vmem:[%s978] sm:$0x3]
        %p980 = scmp.gt.s32.totalorder %s976, 0
        %s981 = scalar_select %p980, 1, 0
        %v982 = vstv %s981
        %vm983 = vcmp.eq.s32.totalorder %v982, 1
        %v984 = vsel %vm983, %v979, %v975
        %985 = vset.pattern.permute.xlu0 0
        %986 = vperm.xlu0 %985, %v984
        %v987 = vpop.permute.xlu0 %986
        %vm988 = vcmp.eq.s32.totalorder %v955, %v987
        %v989 = vsel %vm988, 1, 0
        %v990 = vcvt.s32.f32 %v989
        %v991 = vpack.c.bf16 %v990, %v990
        %v992 = vld [vmem:[%s6] sm:$0xf]
        %v993 = vld [vmem:[%s6 + $0x4] sm:$0xf]
        %v994 = vld [vmem:[%s6 + $0x8] sm:$0xf]
        %v995 = vld [vmem:[%s6 + $0xc] sm:$0xf]
        %v1000 = vunpack.c.l.b16 %v992
        %v1001 = vunpack.c.l.b16 %v993
        %v1002 = vunpack.c.l.b16 %v994
        %v1003 = vunpack.c.l.b16 %v995
        %v1004 = vpack.c.b16 %v1001, %v1000
        %v1005 = vpack.c.b16 %v1003, %v1002
        %v1009 = vsel %vm483, %v991, 0
        %1011 = vmatprep.subr.bf16.mxu0 0
        %1012 = vmatpush1.bf16.msra.mxu0 %v1004
        %1013 = vmatprep.subr.bf16.mxu0 0
        %1014 = vmatpush1.bf16.msra.mxu0 %v1005
        %1015 = vmatprep.subr.bf16.mxu0 0
        %1016 = vmatpush1.bf16.msra.mxu0 0
        %1017 = vmatprep.subr.bf16.mxu0 0
        %1018 = vmatpush1.bf16.msra.mxu0 0
        %1019 = vmatprep.subr.bf16.mxu0 0
        %1020 = vmatpush1.bf16.msra.mxu0 0
        %1021 = vmatprep.subr.bf16.mxu0 0
        %1022 = vmatpush1.bf16.msra.mxu0 0
        %1023 = vmatprep.subr.bf16.mxu0 0
        %1024 = vmatpush1.bf16.msra.mxu0 0
        %1025 = vmatprep.subr.bf16.mxu0 0
        %1026 = vmatpush1.bf16.msra.mxu0 0
        %1027 = vmatprep.subr.bf16.mxu0 0
        %1028 = vmatpush1.bf16.msra.mxu0 0
        %1029 = vmatprep.subr.bf16.mxu0 0
        %1030 = vmatpush1.bf16.msra.mxu0 0
        %1031 = vmatprep.subr.bf16.mxu0 0
        %1032 = vmatpush1.bf16.msra.mxu0 0
        %1033 = vmatprep.subr.bf16.mxu0 0
        %1034 = vmatpush1.bf16.msra.mxu0 0
        %1035 = vmatprep.subr.bf16.mxu0 0
        %1036 = vmatpush1.bf16.msra.mxu0 0
        %1037 = vmatprep.subr.bf16.mxu0 0
        %1038 = vmatpush1.bf16.msra.mxu0 0
        %1039 = vmatprep.subr.bf16.mxu0 0
        %1040 = vmatpush1.bf16.msra.mxu0 0
        %1041 = vmatprep.subr.bf16.mxu0 0
        %1042 = vmatpush1.bf16.msra.mxu0 0
        %1043 = vmatprep.mubr.bf16.mxu0 0
        %1044 = vmatmul.mubr.bf16.gmra.mrb[0].mxu0 %v1009
        %v1045 = vpop.f32.mrb[0].mxu0
        %v1046 = vadd.f32 0.0, %v1045
        %v1047 = vpop.f32.mrb[0].mxu0
        %v1048 = vpop.f32.mrb[0].mxu0
        %v1049 = vpop.f32.mrb[0].mxu0
        %1050 = vdwg.mxu0
        %vm1051 = vcmask 123904
        %1052 = vst.msk [vmem:[#allocation3] sm:$0x3] %vm1051, %v1046
        %1053 = vst.msk [vmem:[#allocation2] sm:$0x3] %vm566, %v863
        %s1054 = sand.u32 %s337, 1
        %s1055 = scalar_lea.sflag [#allocation7], %s1054
        %s1056 = sand.u32 %s337, 1
        %s1057 = smul.addr %s1056, 2
        %s1058 = scalar_lea.vmem [#allocation6], %s1057
        // Predicated region
        $region81: #{seq2seq_forward.5} parent=75 // pred_check
          %p1059 = pneg %p347
        $region82: #{seq2seq_forward.5} parent=75 // pred_check_branch
          %1061 = sbr.rel (%p1059) target = $region84
        $region83: #{seq2seq_forward.5} parent=75 // pred_region
          %s1063 = ssub.s32 32, 32
          %1064 = vsyncadd %s1055, %s1063
          %s1065 = smul.addr %s35, 32
          %s1066 = scalar_lea.hbm %s15, %s1065
          %s1068 = sshll.u32 %s1058, 4
          %s1069 = int_to_ptr.vmem [resolvable:$true] %s1068
          %1071 = dma.vmem_to_hbm [thread:$0]  %s1069, 32, %s1066, %s1055
        $region84: #{seq2seq_forward.5} parent=75 // pred_fallthru
          _
      $region76: #{seq2seq_forward.5} parent=5 // pred_fallthru
        _
      %p1072 = scmp.le.s32.totalorder 2, %s30
      // Predicated region
      $region85: #{seq2seq_forward.5} parent=5 // pred_check
        %p1073 = pneg %p1072
      $region86: #{seq2seq_forward.5} parent=5 // pred_check_branch
        %1075 = sbr.rel (%p1073) target = $region88
      $region87: #{seq2seq_forward.5} parent=5 // pred_region
        %s1076 = ssub.s32 %s30, 2
        // Predicated region
        $region89: #{seq2seq_forward.5} parent=87 // pred_check
          %p1077 = pneg %p353
        $region90: #{seq2seq_forward.5} parent=87 // pred_check_branch
          %1079 = sbr.rel (%p1077) target = $region92
        $region91: #{seq2seq_forward.5} parent=87 // pred_region
          %s1080 = sand.u32 %s338, 1
          %s1081 = scalar_lea.sflag [#allocation7], %s1080
          %s1082 = sand.u32 %s338, 1
          %s1083 = smul.addr %s1082, 2
          %s1084 = scalar_lea.vmem [#allocation6], %s1083
          %1085 = dma.done %s1081, 32
        $region92: #{seq2seq_forward.5} parent=87 // pred_fallthru
          _
      $region88: #{seq2seq_forward.5} parent=5 // pred_fallthru
        _
    $region6: #{seq2seq_forward.5} parent=1 // loop_footer
      %s34 = sadd.s32 1, %s30
    $region7: #{seq2seq_forward.5} parent=1 // loop_footer_branch
      %29 = sbr.rel target = $region3
    $region8: #{seq2seq_forward.5} parent=1 // loop_exit
      _
    %1086 = vsyncpa [#allocation7], 1
    %s1087 = scalar_lea.sflag [#allocation7], 1
    %1088 = vsyncpa %s1087, 1

</llo_original>
